<compile_context>
chip_gen: v5e
topology: v5e:2x2
jax: 0.10.0
libtpu: 0.0.40
codegen_flags: <defaults>
</compile_context>

<pallas_src>
import functools

import jax
import jax.numpy as jnp
from jax.experimental import pallas as pl
from jax.experimental.pallas import tpu as pltpu

_LANE = 128


def _reducer_kernel(x_ref, w1_ref, b1_ref, w2_ref, b2_ref, w3_ref, b3_ref,
                    gamma_ref, beta_ref, o_ref, acc_ref, *,
                    eps, out_dim, out_pad, k_tile, d_total, mask_last_k):
    """One (row-tile, K-slab) grid step of the fused 3-layer MLP + LayerNorm."""
    k = pl.program_id(1)

    # In-kernel bf16 ingest of the f32 x slab (no wrapper-side cast/pad pass).
    x_bf = x_ref[...].astype(jnp.bfloat16)
    if mask_last_k:
        # D is not a multiple of the K slab: zero the out-of-range lanes so the
        # boundary block's unspecified data never reaches the accumulator
        # (W1's padded K rows are zero as well).
        col = jax.lax.broadcasted_iota(jnp.int32, x_bf.shape, 1) + k * k_tile
        x_bf = jnp.where(col < d_total, x_bf, jnp.zeros_like(x_bf))

    partial = jnp.dot(x_bf, w1_ref[...], preferred_element_type=jnp.float32)

    @pl.when(k == 0)
    def _():
        acc_ref[...] = partial          # init fused into the first K step

    @pl.when(k > 0)
    def _():
        acc_ref[...] += partial

    @pl.when(k == pl.num_programs(1) - 1)
    def _():
        # Dropout(0.1) layers are identity at inference time.
        # TODO(synk): training-mode Dropout would need pltpu.prng_seed /
        # pltpu.prng_random_bits masking; this kernel implements eval semantics.
        h1 = jnp.maximum(acc_ref[...] + b1_ref[...], 0.0)
        h2 = jnp.maximum(
            jnp.dot(h1.astype(jnp.bfloat16), w2_ref[...],
                    preferred_element_type=jnp.float32) + b2_ref[...], 0.0)
        h3 = jnp.dot(h2.astype(jnp.bfloat16), w3_ref[...],
                     preferred_element_type=jnp.float32) + b3_ref[...]

        # LayerNorm over the first `out_dim` real columns. Padded columns of h3
        # are exactly zero (W3/b3 pads are zero), so the mean needs no mask.
        inv_o = 1.0 / float(out_dim)
        mean = jnp.sum(h3, axis=-1, keepdims=True) * inv_o
        centered = h3 - mean
        if out_pad != out_dim:
            col = jax.lax.broadcasted_iota(jnp.int32, h3.shape, 1)
            centered = jnp.where(col < out_dim, centered, 0.0)
        var = jnp.sum(centered * centered, axis=-1, keepdims=True) * inv_o
        normed = centered * jax.lax.rsqrt(var + eps)
        # gamma/beta are zero in padded columns -> padded output columns are 0.
        o_ref[...] = (normed * gamma_ref[...] + beta_ref[...]).astype(o_ref.dtype)


def _tpu_generation():
    """Returns (vmem_bytes_per_TensorCore, multi_tensorcore_chip)."""
    vmem = 64 * 1024 * 1024            # conservative default (v7x per-TC)
    try:
        vmem = int(pltpu.get_tpu_info().vmem_capacity_bytes)
    except Exception:
        pass
    multi_tc = False
    try:
        kind = jax.devices()[0].device_kind.lower()
        multi_tc = "v7" in kind
    except Exception:
        pass
    if multi_tc:
        # Clamp to the per-TensorCore capacity even if the API reports the
        # chip-level total; keeps double-buffering headroom on v7x.
        vmem = min(vmem, 64 * 1024 * 1024)
    return vmem, multi_tc


def _choose_k_tile(d, max_tk):
    """K slab for the D (= num_nodes) contraction. Returns (tk, d_padded)."""
    max_tk = max(_LANE, (max_tk // _LANE) * _LANE)
    if d <= max_tk:
        return d, d                               # single slab, no K grid
    lo = min(512, max_tk)                         # keep x DMAs reasonably large
    for tk in range(max_tk, lo - 1, -_LANE):      # largest 128-multiple divisor
        if d % tk == 0:
            return tk, d
    d_pad = pl.cdiv(d, max_tk) * max_tk           # awkward D: mask last slab
    return max_tk, d_pad


def _choose_row_tile(n, tk, h, h2, o_pad, vmem_cap, multi_tc):
    """Largest row tile that fits the VMEM budget.  On multi-TC chips (v7x)
    prefer an even number of row tiles so both TensorCores are balanced."""
    n8 = max(8, pl.cdiv(n, 8) * 8)
    const_bytes = (2 * tk * h * 2                          # W1 slab bf16, 2 bufs
                   + (h * h2 + h2 * o_pad) * 2             # W2, W3 (bf16, resident)
                   + (h + h2 + 3 * o_pad) * 4)             # biases + gamma/beta
    budget = max(int(vmem_cap * 0.55) - const_bytes, 1 << 20)
    per_row = (2 * tk * 4 + tk * 2        # x slab: f32 double-buffered + bf16 copy
               + 2 * o_pad * 4            # output tile, f32, double-buffered
               + h * 4                    # layer-1 f32 accumulator scratch
               + (2 * h + 2 * h2 + 4 * o_pad) * 4)   # epilogue temporaries
    cands = []
    for c in (4096, 2048, 1024, 512, 256, 128):
        c = min(c, n8)
        if c not in cands:
            cands.append(c)
    fitting = [c for c in cands if c * per_row <= budget]
    if not fitting:
        fitting = [min(128, n8)]          # never fall back below 128 rows
    if multi_tc:
        for c in fitting:                 # largest tile with an even tile count
            m = pl.cdiv(n, c)
            if m >= 2 and m % 2 == 0:
                return c
        for c in fitting:                 # else: at least 2 tiles
            if pl.cdiv(n, c) >= 2:
                return c
        half = max(8, pl.cdiv(pl.cdiv(n, 2), 8) * 8)
        if half * per_row <= budget:
            return half
    return fitting[0]


def tppr_reducer_forward(x, params, *, eps=1e-5, block_rows=None, max_k_tile=1024):
    """x: [num_nodes, input_dim] float32 -> [num_nodes, output_dim] float32."""
    n, d = x.shape
    w1, b1, w2, b2, w3, b3, gamma, beta = params
    h = w1.shape[1]
    h2 = w2.shape[1]
    o = w3.shape[1]
    o_pad = o if o % _LANE == 0 else pl.cdiv(o, _LANE) * _LANE

    # --- K (contraction) tiling. x stays f32 in HBM; cast happens in-kernel.
    tk, d_pad = _choose_k_tile(d, max_k_tile)
    mask_last_k = d_pad != d

    # --- Small weights: one-off bf16 cast (halves their repeated HBM re-reads).
    w1_in = w1.astype(jnp.bfloat16)
    if mask_last_k:
        w1_in = jnp.pad(w1_in, ((0, d_pad - d), (0, 0)))   # zero K-pad (cheap)
    w2_in = w2.astype(jnp.bfloat16)
    w3_in = w3.astype(jnp.bfloat16)

    # --- Lane-dense output params (only when O is not already 128-aligned).
    if o_pad != o:
        w3_in = jnp.pad(w3_in, ((0, 0), (0, o_pad - o)))
        b3_in = jnp.pad(b3, ((0, 0), (0, o_pad - o)))
        gamma_in = jnp.pad(gamma, ((0, 0), (0, o_pad - o)))
        beta_in = jnp.pad(beta, ((0, 0), (0, o_pad - o)))
    else:
        b3_in, gamma_in, beta_in = b3, gamma, beta

    # --- Row tiling sized against this generation's (per-core) VMEM.
    vmem_cap, multi_tc = _tpu_generation()
    n8 = max(8, pl.cdiv(n, 8) * 8)
    if block_rows is not None:
        tm = min(max(8, pl.cdiv(block_rows, 8) * 8), n8)   # validated: mult of 8
    else:
        tm = _choose_row_tile(n, tk, h, h2, o_pad, vmem_cap, multi_tc)
    n_m = pl.cdiv(n, tm)
    n_k = d_pad // tk

    vmem_need = (2 * tm * tk * 4 + tm * tk * 2       # x: f32 x2 bufs + bf16 copy
                 + 2 * tk * h * 2                    # W1 slab bf16, 2 bufs
                 + 2 * tm * o_pad * 4                # output tile, 2 bufs
                 + tm * h * 4                        # layer-1 accumulator
                 + tm * (2 * h + 2 * h2 + 4 * o_pad) * 4   # epilogue temporaries
                 + 2 * ((h * h2 + h2 * o_pad) * 2 + (h + h2 + 3 * o_pad) * 4))
    vmem_limit = int(min(vmem_cap * 3 // 4,          # <= 48 MiB on v7x
                         max(vmem_need + (8 << 20), 32 << 20)))

    full = lambda r, c: pl.BlockSpec((r, c), lambda i, k: (0, 0))

    out_padded = pl.pallas_call(
        functools.partial(_reducer_kernel, eps=eps, out_dim=o, out_pad=o_pad,
                          k_tile=tk, d_total=d, mask_last_k=mask_last_k),
        out_shape=jax.ShapeDtypeStruct((n, o_pad), x.dtype),
        grid_spec=pltpu.PrefetchScalarGridSpec(
            num_scalar_prefetch=0,
            grid=(n_m, n_k),                                   # reduction axis last
            in_specs=[
                pl.BlockSpec((tm, tk), lambda i, k: (i, k)),   # x (f32, cast in-kernel)
                pl.BlockSpec((tk, h), lambda i, k: (k, 0)),    # W1 K slab (bf16)
                full(1, h),                                    # b1
                full(h, h2), full(1, h2),                      # W2 (bf16), b2
                full(h2, o_pad), full(1, o_pad),               # W3 (bf16), b3
                full(1, o_pad), full(1, o_pad),                # gamma, beta
            ],
            out_specs=pl.BlockSpec((tm, o_pad), lambda i, k: (i, 0)),
            scratch_shapes=[pltpu.VMEM((tm, h), jnp.float32)],  # layer-1 accumulator
        ),
        compiler_params=pltpu.CompilerParams(
            dimension_semantics=("parallel", "arbitrary"),
            vmem_limit_bytes=vmem_limit),
    )(x, w1_in, b1, w2_in, b2, w3_in, b3_in, gamma_in, beta_in)

    return out_padded if o_pad == o else out_padded[:, :o]


def init_params(key, input_dim, output_dim, hidden_dim=128):
    """Deterministic init mimicking nn.Linear default (uniform +-1/sqrt(fan_in))
    and nn.LayerNorm default (gamma=1, beta=0). Weights stored [in, out]."""
    dims = [(input_dim, hidden_dim), (hidden_dim, hidden_dim // 2),
            (hidden_dim // 2, output_dim)]
    params = []
    for (fan_in, fan_out) in dims:
        key, kw, kb = jax.random.split(key, 3)
        bound = 1.0 / jnp.sqrt(fan_in)
        w = jax.random.uniform(kw, (fan_in, fan_out), jnp.float32, -bound, bound)
        b = jax.random.uniform(kb, (1, fan_out), jnp.float32, -bound, bound)
        params.extend([w, b])
    gamma = jnp.ones((1, output_dim), jnp.float32)
    beta = jnp.zeros((1, output_dim), jnp.float32)
    params.extend([gamma, beta])
    return tuple(params)


def _reference(x, params, eps=1e-5):
    """Pure-JAX reference mirroring the kernel's bf16 ingest (x/W1 and the
    bf16 epilogue matmuls) with f32 accumulation."""
    w1, b1, w2, b2, w3, b3, gamma, beta = params
    bf = lambda a: a.astype(jnp.bfloat16).astype(jnp.float32)
    hi = jax.lax.Precision.HIGHEST
    h1 = jnp.maximum(jnp.dot(bf(x), bf(w1), precision=hi) + b1, 0.0)
    h2 = jnp.maximum(jnp.dot(bf(h1), bf(w2), precision=hi) + b2, 0.0)
    h3 = jnp.dot(bf(h2), bf(w3), precision=hi) + b3
    mu = jnp.mean(h3, axis=-1, keepdims=True)
    var = jnp.mean((h3 - mu) ** 2, axis=-1, keepdims=True)
    return (h3 - mu) / jnp.sqrt(var + eps) * gamma + beta


if __name__ == "__main__":
    key = jax.random.PRNGKey(0)

    # Test 1: square TPPR matrix (input_dim == num_nodes), divisible shapes.
    num_nodes, hidden_dim, output_dim = 256, 128, 32
    key, kx = jax.random.split(key)
    x = jax.random.uniform(kx, (num_nodes, num_nodes), jnp.float32)
    params = init_params(key, num_nodes, output_dim, hidden_dim)
    out = jax.block_until_ready(tppr_reducer_forward(x, params))
    ref = _reference(x, params)
    assert out.shape == (num_nodes, output_dim)
    assert jnp.allclose(out, ref, atol=2e-2, rtol=2e-2)

    # Test 2: non-divisible num_nodes and non-multiple-of-128 output_dim
    # (cdiv row grid + masked LayerNorm on a lane-padded output tile).
    n2, o2, h2d = 200, 24, 64
    key, kx2 = jax.random.split(key)
    x2 = jax.random.uniform(kx2, (n2, n2), jnp.float32)
    params2 = init_params(key, n2, o2, h2d)
    out2 = jax.block_until_ready(tppr_reducer_forward(x2, params2))
    ref2 = _reference(x2, params2)
    assert out2.shape == (n2, o2)
    assert jnp.allclose(out2, ref2, atol=2e-2, rtol=2e-2)

    # Test 3: K-tiled contraction with a masked (non-divisible) last K slab,
    # exercising the fused accumulator-init and in-kernel K mask paths.
    n3, o3, h3d = 320, 48, 128
    key, kx3 = jax.random.split(key)
    x3 = jax.random.uniform(kx3, (n3, n3), jnp.float32)
    params3 = init_params(key, n3, o3, h3d)
    out3 = jax.block_until_ready(
        tppr_reducer_forward(x3, params3, max_k_tile=256))
    ref3 = _reference(x3, params3)
    assert out3.shape == (n3, o3)
    assert jnp.allclose(out3, ref3, atol=2e-2, rtol=2e-2)

    print("KERNEL_OK")
</pallas_src>

<mosaic_0001>
module attributes {stable_mosaic.version = 11 : i64} {
  func.func @_reducer_kernel(%arg0: i32, %arg1: i32, %arg2: memref<256x256xf32, #tpu.memory_space<vmem>>, %arg3: memref<256x128xbf16, #tpu.memory_space<vmem>>, %arg4: memref<1x128xf32, #tpu.memory_space<vmem>>, %arg5: memref<128x64xbf16, #tpu.memory_space<vmem>>, %arg6: memref<1x64xf32, #tpu.memory_space<vmem>>, %arg7: memref<64x128xbf16, #tpu.memory_space<vmem>>, %arg8: memref<1x128xf32, #tpu.memory_space<vmem>>, %arg9: memref<1x128xf32, #tpu.memory_space<vmem>>, %arg10: memref<1x128xf32, #tpu.memory_space<vmem>>, %arg11: memref<256x128xf32, #tpu.memory_space<vmem>>, %arg12: memref<256x128xf32, #tpu.memory_space<vmem>>) attributes {dimension_semantics = [#tpu.dimension_semantics<parallel>, #tpu.dimension_semantics<arbitrary>], iteration_bounds = array<i64: 1, 1>, scalar_prefetch = 0 : i64, scratch_operands = 1 : i64, tpu.core_type = #tpu.core_type<tc>, window_params = [{transform_indices = @transform_0, window_bounds = array<i64: 256, 256>}, {transform_indices = @transform_1, window_bounds = array<i64: 256, 128>}, {pipeline_mode = #tpu.pipeline_mode<synchronous>, transform_indices = @transform_2, window_bounds = array<i64: 1, 128>}, {pipeline_mode = #tpu.pipeline_mode<synchronous>, transform_indices = @transform_3, window_bounds = array<i64: 128, 64>}, {pipeline_mode = #tpu.pipeline_mode<synchronous>, transform_indices = @transform_4, window_bounds = array<i64: 1, 64>}, {pipeline_mode = #tpu.pipeline_mode<synchronous>, transform_indices = @transform_5, window_bounds = array<i64: 64, 128>}, {pipeline_mode = #tpu.pipeline_mode<synchronous>, transform_indices = @transform_6, window_bounds = array<i64: 1, 128>}, {pipeline_mode = #tpu.pipeline_mode<synchronous>, transform_indices = @transform_7, window_bounds = array<i64: 1, 128>}, {pipeline_mode = #tpu.pipeline_mode<synchronous>, transform_indices = @transform_8, window_bounds = array<i64: 1, 128>}, {transform_indices = @transform_9, window_bounds = array<i64: 256, 128>}]} {
    %c0 = arith.constant 0 : index
    %c0_0 = arith.constant 0 : index
    %0 = vector.load %arg2[%c0, %c0_0] : memref<256x256xf32, #tpu.memory_space<vmem>>, vector<256x256xf32>
    %1 = arith.truncf %0 : vector<256x256xf32> to vector<256x256xbf16>
    %c0_1 = arith.constant 0 : index
    %c0_2 = arith.constant 0 : index
    %2 = vector.load %arg3[%c0_1, %c0_2] : memref<256x128xbf16, #tpu.memory_space<vmem>>, vector<256x128xbf16>
    %cst = arith.constant dense<0.000000e+00> : vector<256x128xf32>
    %3 = tpu.matmul %1, %2, %cst {dimension_numbers = #tpu.dot_dimension_numbers<[1], [0], [0], [1], [0, 0, 1, 1], [], []>} : vector<256x256xbf16>, vector<256x128xbf16>, vector<256x128xf32> -> vector<256x128xf32>
    %c0_i32 = arith.constant 0 : i32
    %4 = arith.cmpi eq, %arg1, %c0_i32 : i32
    %5 = arith.extui %4 : i1 to i32
    %c0_i32_3 = arith.constant 0 : i32
    %6 = arith.cmpi ne, %5, %c0_i32_3 : i32
    scf.if %6 {
      %c0_8 = arith.constant 0 : index
      %c0_9 = arith.constant 0 : index
      %13 = vector.load %arg12[%c0_8, %c0_9] : memref<256x128xf32, #tpu.memory_space<vmem>>, vector<256x128xf32>
      tpu.vector_store %arg12[%c0_8, %c0_9], %3 {strides = array<i32>} : memref<256x128xf32, #tpu.memory_space<vmem>>, vector<256x128xf32>,
    } else {
    }
    %c0_i32_4 = arith.constant 0 : i32
    %7 = arith.cmpi sgt, %arg1, %c0_i32_4 : i32
    %8 = arith.extui %7 : i1 to i32
    %c0_i32_5 = arith.constant 0 : i32
    %9 = arith.cmpi ne, %8, %c0_i32_5 : i32
    scf.if %9 {
      %c0_8 = arith.constant 0 : index
      %c0_9 = arith.constant 0 : index
      %13 = vector.load %arg12[%c0_8, %c0_9] : memref<256x128xf32, #tpu.memory_space<vmem>>, vector<256x128xf32>
      %14 = arith.addf %13, %3 : vector<256x128xf32>
      %c0_10 = arith.constant 0 : index
      %c0_11 = arith.constant 0 : index
      %15 = vector.load %arg12[%c0_10, %c0_11] : memref<256x128xf32, #tpu.memory_space<vmem>>, vector<256x128xf32>
      tpu.vector_store %arg12[%c0_10, %c0_11], %14 {strides = array<i32>} : memref<256x128xf32, #tpu.memory_space<vmem>>, vector<256x128xf32>,
    } else {
    }
    %c0_i32_6 = arith.constant 0 : i32
    %10 = arith.cmpi eq, %arg1, %c0_i32_6 : i32
    %11 = arith.extui %10 : i1 to i32
    %c0_i32_7 = arith.constant 0 : i32
    %12 = arith.cmpi ne, %11, %c0_i32_7 : i32
    scf.if %12 {
      %c0_8 = arith.constant 0 : index
      %c0_9 = arith.constant 0 : index
      %13 = vector.load %arg12[%c0_8, %c0_9] : memref<256x128xf32, #tpu.memory_space<vmem>>, vector<256x128xf32>
      %c0_10 = arith.constant 0 : index
      %c0_11 = arith.constant 0 : index
      %14 = vector.load %arg4[%c0_10, %c0_11] : memref<1x128xf32, #tpu.memory_space<vmem>>, vector<1x128xf32>
      %15 = vector.broadcast %14 : vector<1x128xf32> to vector<256x128xf32>
      %16 = arith.addf %13, %15 : vector<256x128xf32>
      %cst_12 = arith.constant 0.000000e+00 : f32
      %17 = vector.broadcast %cst_12 : f32 to vector<256x128xf32>
      %18 = arith.maximumf %16, %17 : vector<256x128xf32>
      %19 = arith.truncf %18 : vector<256x128xf32> to vector<256x128xbf16>
      %c0_13 = arith.constant 0 : index
      %c0_14 = arith.constant 0 : index
      %20 = vector.load %arg5[%c0_13, %c0_14] : memref<128x64xbf16, #tpu.memory_space<vmem>>, vector<128x64xbf16>
      %cst_15 = arith.constant dense<0.000000e+00> : vector<256x64xf32>
      %21 = tpu.matmul %19, %20, %cst_15 {dimension_numbers = #tpu.dot_dimension_numbers<[1], [0], [0], [1], [0, 0, 1, 1], [], []>} : vector<256x128xbf16>, vector<128x64xbf16>, vector<256x64xf32> -> vector<256x64xf32>
      %c0_16 = arith.constant 0 : index
      %c0_17 = arith.constant 0 : index
      %22 = vector.load %arg6[%c0_16, %c0_17] : memref<1x64xf32, #tpu.memory_space<vmem>>, vector<1x64xf32>
      %23 = vector.broadcast %22 : vector<1x64xf32> to vector<256x64xf32>
      %24 = arith.addf %21, %23 : vector<256x64xf32>
      %cst_18 = arith.constant 0.000000e+00 : f32
      %25 = vector.broadcast %cst_18 : f32 to vector<256x64xf32>
      %26 = arith.maximumf %24, %25 : vector<256x64xf32>
      %27 = arith.truncf %26 : vector<256x64xf32> to vector<256x64xbf16>
      %c0_19 = arith.constant 0 : index
      %c0_20 = arith.constant 0 : index
      %28 = vector.load %arg7[%c0_19, %c0_20] : memref<64x128xbf16, #tpu.memory_space<vmem>>, vector<64x128xbf16>
      %cst_21 = arith.constant dense<0.000000e+00> : vector<256x128xf32>
      %29 = tpu.matmul %27, %28, %cst_21 {dimension_numbers = #tpu.dot_dimension_numbers<[1], [0], [0], [1], [0, 0, 1, 1], [], []>} : vector<256x64xbf16>, vector<64x128xbf16>, vector<256x128xf32> -> vector<256x128xf32>
      %c0_22 = arith.constant 0 : index
      %c0_23 = arith.constant 0 : index
      %30 = vector.load %arg8[%c0_22, %c0_23] : memref<1x128xf32, #tpu.memory_space<vmem>>, vector<1x128xf32>
      %31 = vector.broadcast %30 : vector<1x128xf32> to vector<256x128xf32>
      %32 = arith.addf %29, %31 : vector<256x128xf32>
      %cst_24 = arith.constant dense<0.000000e+00> : vector<256xf32>
      %33 = vector.multi_reduction <add>, %32, %cst_24 [1] : vector<256x128xf32> to vector<256xf32>
      %34 = vector.shape_cast %33 : vector<256xf32> to vector<256x1xf32>
      %cst_25 = arith.constant 3.125000e-02 : f32
      %35 = vector.broadcast %cst_25 : f32 to vector<256x1xf32>
      %36 = arith.mulf %34, %35 : vector<256x1xf32>
      %37 = vector.broadcast %36 : vector<256x1xf32> to vector<256x128xf32>
      %38 = arith.subf %32, %37 : vector<256x128xf32>
      %39 = tpu.iota {dimensions = array<i32: 1>} : vector<256x128xi32>
      %c32_i32 = arith.constant 32 : i32
      %40 = vector.broadcast %c32_i32 : i32 to vector<256x128xi32>
      %41 = arith.cmpi slt, %39, %40 : vector<256x128xi32>
      %cst_26 = arith.constant 0.000000e+00 : f32
      %42 = vector.broadcast %cst_26 : f32 to vector<256x128xf32>
      %43 = arith.select %41, %38, %42 : vector<256x128xi1>, vector<256x128xf32>
      %44 = arith.mulf %43, %43 : vector<256x128xf32>
      %cst_27 = arith.constant dense<0.000000e+00> : vector<256xf32>
      %45 = vector.multi_reduction <add>, %44, %cst_27 [1] : vector<256x128xf32> to vector<256xf32>
      %46 = vector.shape_cast %45 : vector<256xf32> to vector<256x1xf32>
      %cst_28 = arith.constant 3.125000e-02 : f32
      %47 = vector.broadcast %cst_28 : f32 to vector<256x1xf32>
      %48 = arith.mulf %46, %47 : vector<256x1xf32>
      %cst_29 = arith.constant 9.99999974E-6 : f32
      %49 = vector.broadcast %cst_29 : f32 to vector<256x1xf32>
      %50 = arith.addf %48, %49 : vector<256x1xf32>
      %51 = math.rsqrt %50 : vector<256x1xf32>
      %52 = vector.broadcast %51 : vector<256x1xf32> to vector<256x128xf32>
      %53 = arith.mulf %43, %52 : vector<256x128xf32>
      %c0_30 = arith.constant 0 : index
      %c0_31 = arith.constant 0 : index
      %54 = vector.load %arg9[%c0_30, %c0_31] : memref<1x128xf32, #tpu.memory_space<vmem>>, vector<1x128xf32>
      %55 = vector.broadcast %54 : vector<1x128xf32> to vector<256x128xf32>
      %56 = arith.mulf %53, %55 : vector<256x128xf32>
      %c0_32 = arith.constant 0 : index
      %c0_33 = arith.constant 0 : index
      %57 = vector.load %arg10[%c0_32, %c0_33] : memref<1x128xf32, #tpu.memory_space<vmem>>, vector<1x128xf32>
      %58 = vector.broadcast %57 : vector<1x128xf32> to vector<256x128xf32>
      %59 = arith.addf %56, %58 : vector<256x128xf32>
      %c0_34 = arith.constant 0 : index
      %c0_35 = arith.constant 0 : index
      %60 = vector.load %arg11[%c0_34, %c0_35] : memref<256x128xf32, #tpu.memory_space<vmem>>, vector<256x128xf32>
      tpu.vector_store %arg11[%c0_34, %c0_35], %59 {strides = array<i32>} : memref<256x128xf32, #tpu.memory_space<vmem>>, vector<256x128xf32>,
    } else {
    }
    return
  }
  func.func @transform_0(%arg0: i32, %arg1: i32) -> (i32, i32) {
    %c0_i32 = arith.constant 0 : i32
    return %arg0, %arg1 : i32, i32
  }
  func.func @transform_1(%arg0: i32, %arg1: i32) -> (i32, i32) {
    %c0_i32 = arith.constant 0 : i32
    %c0_i32_0 = arith.constant 0 : i32
    return %arg1, %c0_i32 : i32, i32
  }
  func.func @transform_2(%arg0: i32, %arg1: i32) -> (i32, i32) {
    %c0_i32 = arith.constant 0 : i32
    %c0_i32_0 = arith.constant 0 : i32
    %c0_i32_1 = arith.constant 0 : i32
    return %c0_i32, %c0_i32_0 : i32, i32
  }
  func.func @transform_3(%arg0: i32, %arg1: i32) -> (i32, i32) {
    %c0_i32 = arith.constant 0 : i32
    %c0_i32_0 = arith.constant 0 : i32
    %c0_i32_1 = arith.constant 0 : i32
    return %c0_i32, %c0_i32_0 : i32, i32
  }
  func.func @transform_4(%arg0: i32, %arg1: i32) -> (i32, i32) {
    %c0_i32 = arith.constant 0 : i32
    %c0_i32_0 = arith.constant 0 : i32
    %c0_i32_1 = arith.constant 0 : i32
    return %c0_i32, %c0_i32_0 : i32, i32
  }
  func.func @transform_5(%arg0: i32, %arg1: i32) -> (i32, i32) {
    %c0_i32 = arith.constant 0 : i32
    %c0_i32_0 = arith.constant 0 : i32
    %c0_i32_1 = arith.constant 0 : i32
    return %c0_i32, %c0_i32_0 : i32, i32
  }
  func.func @transform_6(%arg0: i32, %arg1: i32) -> (i32, i32) {
    %c0_i32 = arith.constant 0 : i32
    %c0_i32_0 = arith.constant 0 : i32
    %c0_i32_1 = arith.constant 0 : i32
    return %c0_i32, %c0_i32_0 : i32, i32
  }
  func.func @transform_7(%arg0: i32, %arg1: i32) -> (i32, i32) {
    %c0_i32 = arith.constant 0 : i32
    %c0_i32_0 = arith.constant 0 : i32
    %c0_i32_1 = arith.constant 0 : i32
    return %c0_i32, %c0_i32_0 : i32, i32
  }
  func.func @transform_8(%arg0: i32, %arg1: i32) -> (i32, i32) {
    %c0_i32 = arith.constant 0 : i32
    %c0_i32_0 = arith.constant 0 : i32
    %c0_i32_1 = arith.constant 0 : i32
    return %c0_i32, %c0_i32_0 : i32, i32
  }
  func.func @transform_9(%arg0: i32, %arg1: i32) -> (i32, i32) {
    %c0_i32 = arith.constant 0 : i32
    %c0_i32_0 = arith.constant 0 : i32
    return %arg0, %c0_i32 : i32, i32
  }
}

</mosaic_0001>

<llo_original>
// kernel: tpu_custom_call.1
$region0: #{tpu_custom_call.1}
  #allocation0 [shape = 'u32[]', space=smem, size = 0x4, offset = 0x4, fixed_abs, tag = 'smem constant byte address 0x4 - core index']
  #allocation1 [shape = 'u32[72,128]{1,0:T(1,128)}', space=vmem, size = 0x9000, scoped, tag = 'internal scratch']
  #allocation2 [shape = 'f32[256,128]{1,0:T(8,128)}', space=vmem, size = 0x20000, scoped, tag = 'scratch operand']
  %s0 = inlined_call_operand.hbm [shape: f32[256,256], index: 0, kind: input, shape index: {}]
  %s1 = inlined_call_operand.hbm [shape: bf16[256,128], index: 1, kind: input, shape index: {}]
  %s2 = inlined_call_operand.vmem [shape: f32[1,128], index: 2, kind: input, shape index: {}]
  %s3 = inlined_call_operand.vmem [shape: bf16[128,64], index: 3, kind: input, shape index: {}]
  %s4 = inlined_call_operand.vmem [shape: f32[1,64], index: 4, kind: input, shape index: {}]
  %s5 = inlined_call_operand.vmem [shape: bf16[64,128], index: 5, kind: input, shape index: {}]
  %s6 = inlined_call_operand.vmem [shape: f32[1,128], index: 6, kind: input, shape index: {}]
  %s7 = inlined_call_operand.vmem [shape: f32[1,128], index: 7, kind: input, shape index: {}]
  %s8 = inlined_call_operand.vmem [shape: f32[1,128], index: 8, kind: input, shape index: {}]
  %s9 = inlined_call_operand.hbm [shape: f32[256,128], index: 9, kind: output, shape index: {}]
  %s10 = sld [smem:[#allocation0]]
  $region66: #{tpu_custom_call.1} parent=0
    _
  %s12 = ssub.s32 1, %s10
  %s13 = scalar_select 0, %s12, %s10
  $region1: #{tpu_custom_call.1} parent=0
    #allocation3 [shape = 'u8[262144]{0}', space=vmem, size = 0x40000, scoped, tag = 'input window, operand 0, single buffered']
    #allocation4 [shape = 's32[1]{0}', space=sflag, size = 0x4, scoped, tag = 'scoped memory for tpu_custom_call.1']
    #allocation5 [shape = 's32[1]{0}', space=sflag, size = 0x4, scoped, tag = 'scoped memory for tpu_custom_call.1']
    #allocation6 [shape = 'u8[65536]{0}', space=vmem, size = 0x10000, scoped, tag = 'input window, operand 1, single buffered']
    #allocation7 [shape = 's32[1]{0}', space=sflag, size = 0x4, scoped, tag = 'scoped memory for tpu_custom_call.1']
    #allocation8 [shape = 'u8[131072]{0}', space=vmem, size = 0x20000, scoped, tag = 'output window, operand 0, single buffered']
    %14 = vsyncpa [#allocation4], 0
    %15 = vsyncpa [#allocation7], 0
    %16 = vsyncpa [#allocation5], 0
    // Predicated region
    $region2: #{tpu_custom_call.1} parent=1 // pred_check
      _
    $region3: #{tpu_custom_call.1} parent=1 // pred_check_branch
      %18 = sbr.rel (0) target = $region5
    $region4: #{tpu_custom_call.1} parent=1 // pred_region
      %20 = vsyncadd [#allocation4], 0
      %s21 = sshll.u32 %s0, 4
      %s22 = int_to_ptr.hbm [resolvable:$true] %s21
      %s23 = sshll.u32 [#allocation3], 4
      %s24 = int_to_ptr.vmem [resolvable:$true] %s23
      %29 = dma.hbm_to_vmem [thread:$0]  %s22, 8192, %s24, [#allocation4], 256, 256, 16
    $region5: #{tpu_custom_call.1} parent=1 // pred_fallthru
      _
    // Predicated region
    $region6: #{tpu_custom_call.1} parent=1 // pred_check
      _
    $region7: #{tpu_custom_call.1} parent=1 // pred_check_branch
      %31 = sbr.rel (0) target = $region9
    $region8: #{tpu_custom_call.1} parent=1 // pred_region
      %33 = vsyncadd [#allocation7], 0
      %s34 = sshll.u32 %s1, 4
      %s35 = int_to_ptr.hbm [resolvable:$true] %s34
      %s36 = sshll.u32 [#allocation6], 4
      %s37 = int_to_ptr.vmem [resolvable:$true] %s36
      %42 = dma.hbm_to_vmem [thread:$0]  %s35, 2048, %s37, [#allocation7], 64, 64, 4
    $region9: #{tpu_custom_call.1} parent=1 // pred_fallthru
      _
    // Predicated region
    $region10: #{tpu_custom_call.1} parent=1 // pred_check
      _
    $region11: #{tpu_custom_call.1} parent=1 // pred_check_branch
      %44 = sbr.rel (0) target = $region13
    $region12: #{tpu_custom_call.1} parent=1 // pred_region
      _
    $region13: #{tpu_custom_call.1} parent=1 // pred_fallthru
      _
    // Predicated region
    $region14: #{tpu_custom_call.1} parent=1 // pred_check
      _
    $region15: #{tpu_custom_call.1} parent=1 // pred_check_branch
      %46 = sbr.rel (0) target = $region17
    $region16: #{tpu_custom_call.1} parent=1 // pred_region
      _
    $region17: #{tpu_custom_call.1} parent=1 // pred_fallthru
      _
    // Predicated region
    $region18: #{tpu_custom_call.1} parent=1 // pred_check
      _
    $region19: #{tpu_custom_call.1} parent=1 // pred_check_branch
      %48 = sbr.rel (0) target = $region21
    $region20: #{tpu_custom_call.1} parent=1 // pred_region
      _
    $region21: #{tpu_custom_call.1} parent=1 // pred_fallthru
      _
    // Predicated region
    $region22: #{tpu_custom_call.1} parent=1 // pred_check
      _
    $region23: #{tpu_custom_call.1} parent=1 // pred_check_branch
      %50 = sbr.rel (0) target = $region25
    $region24: #{tpu_custom_call.1} parent=1 // pred_region
      _
    $region25: #{tpu_custom_call.1} parent=1 // pred_fallthru
      _
    // Predicated region
    $region26: #{tpu_custom_call.1} parent=1 // pred_check
      _
    $region27: #{tpu_custom_call.1} parent=1 // pred_check_branch
      %52 = sbr.rel (0) target = $region29
    $region28: #{tpu_custom_call.1} parent=1 // pred_region
      _
    $region29: #{tpu_custom_call.1} parent=1 // pred_fallthru
      _
    // Predicated region
    $region30: #{tpu_custom_call.1} parent=1 // pred_check
      _
    $region31: #{tpu_custom_call.1} parent=1 // pred_check_branch
      %54 = sbr.rel (0) target = $region33
    $region32: #{tpu_custom_call.1} parent=1 // pred_region
      _
    $region33: #{tpu_custom_call.1} parent=1 // pred_fallthru
      _
    // Predicated region
    $region34: #{tpu_custom_call.1} parent=1 // pred_check
      _
    $region35: #{tpu_custom_call.1} parent=1 // pred_check_branch
      %56 = sbr.rel (0) target = $region37
    $region36: #{tpu_custom_call.1} parent=1 // pred_region
      _
    $region37: #{tpu_custom_call.1} parent=1 // pred_fallthru
      _
    // Predicated region
    $region38: #{tpu_custom_call.1} parent=1 // pred_check
      _
    $region39: #{tpu_custom_call.1} parent=1 // pred_check_branch
      %58 = sbr.rel (0) target = $region41
    $region40: #{tpu_custom_call.1} parent=1 // pred_region
      %60 = dma.done [#allocation4], 8192
    $region41: #{tpu_custom_call.1} parent=1 // pred_fallthru
      _
    // Predicated region
    $region42: #{tpu_custom_call.1} parent=1 // pred_check
      _
    $region43: #{tpu_custom_call.1} parent=1 // pred_check_branch
      %62 = sbr.rel (0) target = $region45
    $region44: #{tpu_custom_call.1} parent=1 // pred_region
      %64 = dma.done [#allocation7], 2048
    $region45: #{tpu_custom_call.1} parent=1 // pred_fallthru
      _
    %v66 = vld [vmem:[#allocation3] sm:$0xff]
    %v67 = vld [vmem:[#allocation3 + $0x8] sm:$0xff]
    %v68 = vld [vmem:[#allocation3 + $0x10] sm:$0xff]
    %v69 = vld [vmem:[#allocation3 + $0x18] sm:$0xff]
    %v70 = vld [vmem:[#allocation3 + $0x20] sm:$0xff]
    %v71 = vld [vmem:[#allocation3 + $0x28] sm:$0xff]
    %v72 = vld [vmem:[#allocation3 + $0x30] sm:$0xff]
    %v73 = vld [vmem:[#allocation3 + $0x38] sm:$0xff]
    %v74 = vld [vmem:[#allocation3 + $0x40] sm:$0xff]
    %v75 = vld [vmem:[#allocation3 + $0x48] sm:$0xff]
    %v76 = vld [vmem:[#allocation3 + $0x50] sm:$0xff]
    %v77 = vld [vmem:[#allocation3 + $0x58] sm:$0xff]
    %v78 = vld [vmem:[#allocation3 + $0x60] sm:$0xff]
    %v79 = vld [vmem:[#allocation3 + $0x68] sm:$0xff]
    %v80 = vld [vmem:[#allocation3 + $0x70] sm:$0xff]
    %v81 = vld [vmem:[#allocation3 + $0x78] sm:$0xff]
    %v82 = vld [vmem:[#allocation3 + $0x80] sm:$0xff]
    %v83 = vld [vmem:[#allocation3 + $0x88] sm:$0xff]
    %v84 = vld [vmem:[#allocation3 + $0x90] sm:$0xff]
    %v85 = vld [vmem:[#allocation3 + $0x98] sm:$0xff]
    %v86 = vld [vmem:[#allocation3 + $0xa0] sm:$0xff]
    %v87 = vld [vmem:[#allocation3 + $0xa8] sm:$0xff]
    %v88 = vld [vmem:[#allocation3 + $0xb0] sm:$0xff]
    %v89 = vld [vmem:[#allocation3 + $0xb8] sm:$0xff]
    %v90 = vld [vmem:[#allocation3 + $0xc0] sm:$0xff]
    %v91 = vld [vmem:[#allocation3 + $0xc8] sm:$0xff]
    %v92 = vld [vmem:[#allocation3 + $0xd0] sm:$0xff]
    %v93 = vld [vmem:[#allocation3 + $0xd8] sm:$0xff]
    %v94 = vld [vmem:[#allocation3 + $0xe0] sm:$0xff]
    %v95 = vld [vmem:[#allocation3 + $0xe8] sm:$0xff]
    %v96 = vld [vmem:[#allocation3 + $0xf0] sm:$0xff]
    %v97 = vld [vmem:[#allocation3 + $0xf8] sm:$0xff]
    %v98 = vld [vmem:[#allocation3 + $0x100] sm:$0xff]
    %v99 = vld [vmem:[#allocation3 + $0x108] sm:$0xff]
    %v100 = vld [vmem:[#allocation3 + $0x110] sm:$0xff]
    %v101 = vld [vmem:[#allocation3 + $0x118] sm:$0xff]
    %v102 = vld [vmem:[#allocation3 + $0x120] sm:$0xff]
    %v103 = vld [vmem:[#allocation3 + $0x128] sm:$0xff]
    %v104 = vld [vmem:[#allocation3 + $0x130] sm:$0xff]
    %v105 = vld [vmem:[#allocation3 + $0x138] sm:$0xff]
    %v106 = vld [vmem:[#allocation3 + $0x140] sm:$0xff]
    %v107 = vld [vmem:[#allocation3 + $0x148] sm:$0xff]
    %v108 = vld [vmem:[#allocation3 + $0x150] sm:$0xff]
    %v109 = vld [vmem:[#allocation3 + $0x158] sm:$0xff]
    %v110 = vld [vmem:[#allocation3 + $0x160] sm:$0xff]
    %v111 = vld [vmem:[#allocation3 + $0x168] sm:$0xff]
    %v112 = vld [vmem:[#allocation3 + $0x170] sm:$0xff]
    %v113 = vld [vmem:[#allocation3 + $0x178] sm:$0xff]
    %v114 = vld [vmem:[#allocation3 + $0x180] sm:$0xff]
    %v115 = vld [vmem:[#allocation3 + $0x188] sm:$0xff]
    %v116 = vld [vmem:[#allocation3 + $0x190] sm:$0xff]
    %v117 = vld [vmem:[#allocation3 + $0x198] sm:$0xff]
    %v118 = vld [vmem:[#allocation3 + $0x1a0] sm:$0xff]
    %v119 = vld [vmem:[#allocation3 + $0x1a8] sm:$0xff]
    %v120 = vld [vmem:[#allocation3 + $0x1b0] sm:$0xff]
    %v121 = vld [vmem:[#allocation3 + $0x1b8] sm:$0xff]
    %v122 = vld [vmem:[#allocation3 + $0x1c0] sm:$0xff]
    %v123 = vld [vmem:[#allocation3 + $0x1c8] sm:$0xff]
    %v124 = vld [vmem:[#allocation3 + $0x1d0] sm:$0xff]
    %v125 = vld [vmem:[#allocation3 + $0x1d8] sm:$0xff]
    %v126 = vld [vmem:[#allocation3 + $0x1e0] sm:$0xff]
    %v127 = vld [vmem:[#allocation3 + $0x1e8] sm:$0xff]
    %v128 = vld [vmem:[#allocation3 + $0x1f0] sm:$0xff]
    %v129 = vld [vmem:[#allocation3 + $0x1f8] sm:$0xff]
    %v130 = vpack.c.bf16 %v68, %v66
    %v131 = vpack.c.bf16 %v69, %v67
    %v132 = vpack.c.bf16 %v72, %v70
    %v133 = vpack.c.bf16 %v73, %v71
    %v134 = vpack.c.bf16 %v76, %v74
    %v135 = vpack.c.bf16 %v77, %v75
    %v136 = vpack.c.bf16 %v80, %v78
    %v137 = vpack.c.bf16 %v81, %v79
    %v138 = vpack.c.bf16 %v84, %v82
    %v139 = vpack.c.bf16 %v85, %v83
    %v140 = vpack.c.bf16 %v88, %v86
    %v141 = vpack.c.bf16 %v89, %v87
    %v142 = vpack.c.bf16 %v92, %v90
    %v143 = vpack.c.bf16 %v93, %v91
    %v144 = vpack.c.bf16 %v96, %v94
    %v145 = vpack.c.bf16 %v97, %v95
    %v146 = vpack.c.bf16 %v100, %v98
    %v147 = vpack.c.bf16 %v101, %v99
    %v148 = vpack.c.bf16 %v104, %v102
    %v149 = vpack.c.bf16 %v105, %v103
    %v150 = vpack.c.bf16 %v108, %v106
    %v151 = vpack.c.bf16 %v109, %v107
    %v152 = vpack.c.bf16 %v112, %v110
    %v153 = vpack.c.bf16 %v113, %v111
    %v154 = vpack.c.bf16 %v116, %v114
    %v155 = vpack.c.bf16 %v117, %v115
    %v156 = vpack.c.bf16 %v120, %v118
    %v157 = vpack.c.bf16 %v121, %v119
    %v158 = vpack.c.bf16 %v124, %v122
    %v159 = vpack.c.bf16 %v125, %v123
    %v160 = vpack.c.bf16 %v128, %v126
    %v161 = vpack.c.bf16 %v129, %v127
    %v162 = vld [vmem:[#allocation6] sm:$0xf]
    %v163 = vld [vmem:[#allocation6 + $0x4] sm:$0xf]
    %v164 = vld [vmem:[#allocation6 + $0x8] sm:$0xf]
    %v165 = vld [vmem:[#allocation6 + $0xc] sm:$0xf]
    %v166 = vld [vmem:[#allocation6 + $0x10] sm:$0xf]
    %v167 = vld [vmem:[#allocation6 + $0x14] sm:$0xf]
    %v168 = vld [vmem:[#allocation6 + $0x18] sm:$0xf]
    %v169 = vld [vmem:[#allocation6 + $0x1c] sm:$0xf]
    %v170 = vld [vmem:[#allocation6 + $0x20] sm:$0xf]
    %v171 = vld [vmem:[#allocation6 + $0x24] sm:$0xf]
    %v172 = vld [vmem:[#allocation6 + $0x28] sm:$0xf]
    %v173 = vld [vmem:[#allocation6 + $0x2c] sm:$0xf]
    %v174 = vld [vmem:[#allocation6 + $0x30] sm:$0xf]
    %v175 = vld [vmem:[#allocation6 + $0x34] sm:$0xf]
    %v176 = vld [vmem:[#allocation6 + $0x38] sm:$0xf]
    %v177 = vld [vmem:[#allocation6 + $0x3c] sm:$0xf]
    %v178 = vld [vmem:[#allocation6 + $0x40] sm:$0xf]
    %v179 = vld [vmem:[#allocation6 + $0x44] sm:$0xf]
    %v180 = vld [vmem:[#allocation6 + $0x48] sm:$0xf]
    %v181 = vld [vmem:[#allocation6 + $0x4c] sm:$0xf]
    %v182 = vld [vmem:[#allocation6 + $0x50] sm:$0xf]
    %v183 = vld [vmem:[#allocation6 + $0x54] sm:$0xf]
    %v184 = vld [vmem:[#allocation6 + $0x58] sm:$0xf]
    %v185 = vld [vmem:[#allocation6 + $0x5c] sm:$0xf]
    %v186 = vld [vmem:[#allocation6 + $0x60] sm:$0xf]
    %v187 = vld [vmem:[#allocation6 + $0x64] sm:$0xf]
    %v188 = vld [vmem:[#allocation6 + $0x68] sm:$0xf]
    %v189 = vld [vmem:[#allocation6 + $0x6c] sm:$0xf]
    %v190 = vld [vmem:[#allocation6 + $0x70] sm:$0xf]
    %v191 = vld [vmem:[#allocation6 + $0x74] sm:$0xf]
    %v192 = vld [vmem:[#allocation6 + $0x78] sm:$0xf]
    %v193 = vld [vmem:[#allocation6 + $0x7c] sm:$0xf]
    %v226 = vunpack.c.l.b16 %v162
    %v227 = vunpack.c.l.b16 %v163
    %v228 = vunpack.c.l.b16 %v164
    %v229 = vunpack.c.l.b16 %v165
    %v230 = vunpack.c.l.b16 %v166
    %v231 = vunpack.c.l.b16 %v167
    %v232 = vunpack.c.l.b16 %v168
    %v233 = vunpack.c.l.b16 %v169
    %v234 = vunpack.c.l.b16 %v170
    %v235 = vunpack.c.l.b16 %v171
    %v236 = vunpack.c.l.b16 %v172
    %v237 = vunpack.c.l.b16 %v173
    %v238 = vunpack.c.l.b16 %v174
    %v239 = vunpack.c.l.b16 %v175
    %v240 = vunpack.c.l.b16 %v176
    %v241 = vunpack.c.l.b16 %v177
    %v242 = vunpack.c.l.b16 %v178
    %v243 = vunpack.c.l.b16 %v179
    %v244 = vunpack.c.l.b16 %v180
    %v245 = vunpack.c.l.b16 %v181
    %v246 = vunpack.c.l.b16 %v182
    %v247 = vunpack.c.l.b16 %v183
    %v248 = vunpack.c.l.b16 %v184
    %v249 = vunpack.c.l.b16 %v185
    %v250 = vunpack.c.l.b16 %v186
    %v251 = vunpack.c.l.b16 %v187
    %v252 = vunpack.c.l.b16 %v188
    %v253 = vunpack.c.l.b16 %v189
    %v254 = vunpack.c.l.b16 %v190
    %v255 = vunpack.c.l.b16 %v191
    %v256 = vunpack.c.l.b16 %v192
    %v257 = vunpack.c.l.b16 %v193
    %v258 = vpack.c.b16 %v227, %v226
    %v259 = vpack.c.b16 %v229, %v228
    %v260 = vpack.c.b16 %v231, %v230
    %v261 = vpack.c.b16 %v233, %v232
    %v262 = vpack.c.b16 %v235, %v234
    %v263 = vpack.c.b16 %v237, %v236
    %v264 = vpack.c.b16 %v239, %v238
    %v265 = vpack.c.b16 %v241, %v240
    %v266 = vpack.c.b16 %v243, %v242
    %v267 = vpack.c.b16 %v245, %v244
    %v268 = vpack.c.b16 %v247, %v246
    %v269 = vpack.c.b16 %v249, %v248
    %v270 = vpack.c.b16 %v251, %v250
    %v271 = vpack.c.b16 %v253, %v252
    %v272 = vpack.c.b16 %v255, %v254
    %v273 = vpack.c.b16 %v257, %v256
    %290 = vmatpush.bf16.msra.mxu0 %v265
    %291 = vmatpush.bf16.msra.mxu0 %v264
    %292 = vmatpush.bf16.msra.mxu0 %v263
    %293 = vmatpush.bf16.msra.mxu0 %v262
    %294 = vmatpush.bf16.msra.mxu0 %v261
    %295 = vmatpush.bf16.msra.mxu0 %v260
    %296 = vmatpush.bf16.msra.mxu0 %v259
    %297 = vmatpush.bf16.msra.mxu0 %v258
    %298 = vmatmul.bf16.gmra.mxu0 %v130
    %v299 = vpop.f32.mrf.mxu0
    %v300 = vadd.f32 0.0, %v299
    %v301 = vpop.f32.mrf.mxu0
    %v302 = vadd.f32 0.0, %v301
    %303 = vmatmul.bf16.gmra.mxu0 %v132
    %v304 = vpop.f32.mrf.mxu0
    %v305 = vadd.f32 0.0, %v304
    %v306 = vpop.f32.mrf.mxu0
    %v307 = vadd.f32 0.0, %v306
    %308 = vmatmul.bf16.gmra.mxu0 %v134
    %v309 = vpop.f32.mrf.mxu0
    %v310 = vadd.f32 0.0, %v309
    %v311 = vpop.f32.mrf.mxu0
    %v312 = vadd.f32 0.0, %v311
    %313 = vmatmul.bf16.gmra.mxu0 %v136
    %v314 = vpop.f32.mrf.mxu0
    %v315 = vadd.f32 0.0, %v314
    %v316 = vpop.f32.mrf.mxu0
    %v317 = vadd.f32 0.0, %v316
    %318 = vmatmul.bf16.gmra.mxu0 %v138
    %v319 = vpop.f32.mrf.mxu0
    %v320 = vadd.f32 0.0, %v319
    %v321 = vpop.f32.mrf.mxu0
    %v322 = vadd.f32 0.0, %v321
    %323 = vmatmul.bf16.gmra.mxu0 %v140
    %v324 = vpop.f32.mrf.mxu0
    %v325 = vadd.f32 0.0, %v324
    %v326 = vpop.f32.mrf.mxu0
    %v327 = vadd.f32 0.0, %v326
    %328 = vmatmul.bf16.gmra.mxu0 %v142
    %v329 = vpop.f32.mrf.mxu0
    %v330 = vadd.f32 0.0, %v329
    %v331 = vpop.f32.mrf.mxu0
    %v332 = vadd.f32 0.0, %v331
    %333 = vmatmul.bf16.gmra.mxu0 %v144
    %v334 = vpop.f32.mrf.mxu0
    %v335 = vadd.f32 0.0, %v334
    %v336 = vpop.f32.mrf.mxu0
    %v337 = vadd.f32 0.0, %v336
    %338 = vmatmul.bf16.gmra.mxu0 %v146
    %v339 = vpop.f32.mrf.mxu0
    %v340 = vadd.f32 0.0, %v339
    %v341 = vpop.f32.mrf.mxu0
    %v342 = vadd.f32 0.0, %v341
    %343 = vmatmul.bf16.gmra.mxu0 %v148
    %v344 = vpop.f32.mrf.mxu0
    %v345 = vadd.f32 0.0, %v344
    %v346 = vpop.f32.mrf.mxu0
    %v347 = vadd.f32 0.0, %v346
    %348 = vmatmul.bf16.gmra.mxu0 %v150
    %v349 = vpop.f32.mrf.mxu0
    %v350 = vadd.f32 0.0, %v349
    %v351 = vpop.f32.mrf.mxu0
    %v352 = vadd.f32 0.0, %v351
    %353 = vmatmul.bf16.gmra.mxu0 %v152
    %v354 = vpop.f32.mrf.mxu0
    %v355 = vadd.f32 0.0, %v354
    %v356 = vpop.f32.mrf.mxu0
    %v357 = vadd.f32 0.0, %v356
    %358 = vmatmul.bf16.gmra.mxu0 %v154
    %v359 = vpop.f32.mrf.mxu0
    %v360 = vadd.f32 0.0, %v359
    %v361 = vpop.f32.mrf.mxu0
    %v362 = vadd.f32 0.0, %v361
    %363 = vmatmul.bf16.gmra.mxu0 %v156
    %v364 = vpop.f32.mrf.mxu0
    %v365 = vadd.f32 0.0, %v364
    %v366 = vpop.f32.mrf.mxu0
    %v367 = vadd.f32 0.0, %v366
    %368 = vmatmul.bf16.gmra.mxu0 %v158
    %v369 = vpop.f32.mrf.mxu0
    %v370 = vadd.f32 0.0, %v369
    %v371 = vpop.f32.mrf.mxu0
    %v372 = vadd.f32 0.0, %v371
    %373 = vmatmul.bf16.gmra.mxu0 %v160
    %v374 = vpop.f32.mrf.mxu0
    %v375 = vadd.f32 0.0, %v374
    %v376 = vpop.f32.mrf.mxu0
    %v377 = vadd.f32 0.0, %v376
    %378 = vdwg.mxu0
    %379 = vmatpush.bf16.msra.mxu0 %v273
    %380 = vmatpush.bf16.msra.mxu0 %v272
    %381 = vmatpush.bf16.msra.mxu0 %v271
    %382 = vmatpush.bf16.msra.mxu0 %v270
    %383 = vmatpush.bf16.msra.mxu0 %v269
    %384 = vmatpush.bf16.msra.mxu0 %v268
    %385 = vmatpush.bf16.msra.mxu0 %v267
    %386 = vmatpush.bf16.msra.mxu0 %v266
    %387 = vmatmul.bf16.gmra.mxu0 %v131
    %v388 = vpop.f32.mrf.mxu0
    %v389 = vadd.f32 %v300, %v388
    %v390 = vpop.f32.mrf.mxu0
    %v391 = vadd.f32 %v302, %v390
    %392 = vmatmul.bf16.gmra.mxu0 %v133
    %v393 = vpop.f32.mrf.mxu0
    %v394 = vadd.f32 %v305, %v393
    %v395 = vpop.f32.mrf.mxu0
    %v396 = vadd.f32 %v307, %v395
    %397 = vmatmul.bf16.gmra.mxu0 %v135
    %v398 = vpop.f32.mrf.mxu0
    %v399 = vadd.f32 %v310, %v398
    %v400 = vpop.f32.mrf.mxu0
    %v401 = vadd.f32 %v312, %v400
    %402 = vmatmul.bf16.gmra.mxu0 %v137
    %v403 = vpop.f32.mrf.mxu0
    %v404 = vadd.f32 %v315, %v403
    %v405 = vpop.f32.mrf.mxu0
    %v406 = vadd.f32 %v317, %v405
    %407 = vmatmul.bf16.gmra.mxu0 %v139
    %v408 = vpop.f32.mrf.mxu0
    %v409 = vadd.f32 %v320, %v408
    %v410 = vpop.f32.mrf.mxu0
    %v411 = vadd.f32 %v322, %v410
    %412 = vmatmul.bf16.gmra.mxu0 %v141
    %v413 = vpop.f32.mrf.mxu0
    %v414 = vadd.f32 %v325, %v413
    %v415 = vpop.f32.mrf.mxu0
    %v416 = vadd.f32 %v327, %v415
    %417 = vmatmul.bf16.gmra.mxu0 %v143
    %v418 = vpop.f32.mrf.mxu0
    %v419 = vadd.f32 %v330, %v418
    %v420 = vpop.f32.mrf.mxu0
    %v421 = vadd.f32 %v332, %v420
    %422 = vmatmul.bf16.gmra.mxu0 %v145
    %v423 = vpop.f32.mrf.mxu0
    %v424 = vadd.f32 %v335, %v423
    %v425 = vpop.f32.mrf.mxu0
    %v426 = vadd.f32 %v337, %v425
    %427 = vmatmul.bf16.gmra.mxu0 %v147
    %v428 = vpop.f32.mrf.mxu0
    %v429 = vadd.f32 %v340, %v428
    %v430 = vpop.f32.mrf.mxu0
    %v431 = vadd.f32 %v342, %v430
    %432 = vmatmul.bf16.gmra.mxu0 %v149
    %v433 = vpop.f32.mrf.mxu0
    %v434 = vadd.f32 %v345, %v433
    %v435 = vpop.f32.mrf.mxu0
    %v436 = vadd.f32 %v347, %v435
    %437 = vmatmul.bf16.gmra.mxu0 %v151
    %v438 = vpop.f32.mrf.mxu0
    %v439 = vadd.f32 %v350, %v438
    %v440 = vpop.f32.mrf.mxu0
    %v441 = vadd.f32 %v352, %v440
    %442 = vmatmul.bf16.gmra.mxu0 %v153
    %v443 = vpop.f32.mrf.mxu0
    %v444 = vadd.f32 %v355, %v443
    %v445 = vpop.f32.mrf.mxu0
    %v446 = vadd.f32 %v357, %v445
    %447 = vmatmul.bf16.gmra.mxu0 %v155
    %v448 = vpop.f32.mrf.mxu0
    %v449 = vadd.f32 %v360, %v448
    %v450 = vpop.f32.mrf.mxu0
    %v451 = vadd.f32 %v362, %v450
    %452 = vmatmul.bf16.gmra.mxu0 %v157
    %v453 = vpop.f32.mrf.mxu0
    %v454 = vadd.f32 %v365, %v453
    %v455 = vpop.f32.mrf.mxu0
    %v456 = vadd.f32 %v367, %v455
    %457 = vmatmul.bf16.gmra.mxu0 %v159
    %v458 = vpop.f32.mrf.mxu0
    %v459 = vadd.f32 %v370, %v458
    %v460 = vpop.f32.mrf.mxu0
    %v461 = vadd.f32 %v372, %v460
    %462 = vmatmul.bf16.gmra.mxu0 %v161
    %v463 = vpop.f32.mrf.mxu0
    %v464 = vadd.f32 %v375, %v463
    %v465 = vpop.f32.mrf.mxu0
    %v466 = vadd.f32 %v377, %v465
    %467 = vdwg.mxu0
    %p468 = scmp.eq.s32.totalorder 0, 0
    // Predicated region
    $region46: #{tpu_custom_call.1} parent=1 // pred_check
      %p469 = pneg %p468
    $region47: #{tpu_custom_call.1} parent=1 // pred_check_branch
      %471 = sbr.rel (%p469) target = $region49
    $region48: #{tpu_custom_call.1} parent=1 // pred_region
      %472 = vst [vmem:[#allocation2] sm:$0xff] %v389
      %473 = vst [vmem:[#allocation2 + $0x8] sm:$0xff] %v391
      %474 = vst [vmem:[#allocation2 + $0x10] sm:$0xff] %v394
      %475 = vst [vmem:[#allocation2 + $0x18] sm:$0xff] %v396
      %476 = vst [vmem:[#allocation2 + $0x20] sm:$0xff] %v399
      %477 = vst [vmem:[#allocation2 + $0x28] sm:$0xff] %v401
      %478 = vst [vmem:[#allocation2 + $0x30] sm:$0xff] %v404
      %479 = vst [vmem:[#allocation2 + $0x38] sm:$0xff] %v406
      %480 = vst [vmem:[#allocation2 + $0x40] sm:$0xff] %v409
      %481 = vst [vmem:[#allocation2 + $0x48] sm:$0xff] %v411
      %482 = vst [vmem:[#allocation2 + $0x50] sm:$0xff] %v414
      %483 = vst [vmem:[#allocation2 + $0x58] sm:$0xff] %v416
      %484 = vst [vmem:[#allocation2 + $0x60] sm:$0xff] %v419
      %485 = vst [vmem:[#allocation2 + $0x68] sm:$0xff] %v421
      %486 = vst [vmem:[#allocation2 + $0x70] sm:$0xff] %v424
      %487 = vst [vmem:[#allocation2 + $0x78] sm:$0xff] %v426
      %488 = vst [vmem:[#allocation2 + $0x80] sm:$0xff] %v429
      %489 = vst [vmem:[#allocation2 + $0x88] sm:$0xff] %v431
      %490 = vst [vmem:[#allocation2 + $0x90] sm:$0xff] %v434
      %491 = vst [vmem:[#allocation2 + $0x98] sm:$0xff] %v436
      %492 = vst [vmem:[#allocation2 + $0xa0] sm:$0xff] %v439
      %493 = vst [vmem:[#allocation2 + $0xa8] sm:$0xff] %v441
      %494 = vst [vmem:[#allocation2 + $0xb0] sm:$0xff] %v444
      %495 = vst [vmem:[#allocation2 + $0xb8] sm:$0xff] %v446
      %496 = vst [vmem:[#allocation2 + $0xc0] sm:$0xff] %v449
      %497 = vst [vmem:[#allocation2 + $0xc8] sm:$0xff] %v451
      %498 = vst [vmem:[#allocation2 + $0xd0] sm:$0xff] %v454
      %499 = vst [vmem:[#allocation2 + $0xd8] sm:$0xff] %v456
      %500 = vst [vmem:[#allocation2 + $0xe0] sm:$0xff] %v459
      %501 = vst [vmem:[#allocation2 + $0xe8] sm:$0xff] %v461
      %502 = vst [vmem:[#allocation2 + $0xf0] sm:$0xff] %v464
      %503 = vst [vmem:[#allocation2 + $0xf8] sm:$0xff] %v466
    $region49: #{tpu_custom_call.1} parent=1 // pred_fallthru
      _
    %p504 = scmp.gt.s32.totalorder 0, 0
    // Predicated region
    $region50: #{tpu_custom_call.1} parent=1 // pred_check
      %p505 = pneg %p504
    $region51: #{tpu_custom_call.1} parent=1 // pred_check_branch
      %507 = sbr.rel (%p505) target = $region53
    $region52: #{tpu_custom_call.1} parent=1 // pred_region
      %v508 = vld [vmem:[#allocation2] sm:$0xff]
      %v509 = vld [vmem:[#allocation2 + $0x8] sm:$0xff]
      %v510 = vld [vmem:[#allocation2 + $0x10] sm:$0xff]
      %v511 = vld [vmem:[#allocation2 + $0x18] sm:$0xff]
      %v512 = vld [vmem:[#allocation2 + $0x20] sm:$0xff]
      %v513 = vld [vmem:[#allocation2 + $0x28] sm:$0xff]
      %v514 = vld [vmem:[#allocation2 + $0x30] sm:$0xff]
      %v515 = vld [vmem:[#allocation2 + $0x38] sm:$0xff]
      %v516 = vld [vmem:[#allocation2 + $0x40] sm:$0xff]
      %v517 = vld [vmem:[#allocation2 + $0x48] sm:$0xff]
      %v518 = vld [vmem:[#allocation2 + $0x50] sm:$0xff]
      %v519 = vld [vmem:[#allocation2 + $0x58] sm:$0xff]
      %v520 = vld [vmem:[#allocation2 + $0x60] sm:$0xff]
      %v521 = vld [vmem:[#allocation2 + $0x68] sm:$0xff]
      %v522 = vld [vmem:[#allocation2 + $0x70] sm:$0xff]
      %v523 = vld [vmem:[#allocation2 + $0x78] sm:$0xff]
      %v524 = vld [vmem:[#allocation2 + $0x80] sm:$0xff]
      %v525 = vld [vmem:[#allocation2 + $0x88] sm:$0xff]
      %v526 = vld [vmem:[#allocation2 + $0x90] sm:$0xff]
      %v527 = vld [vmem:[#allocation2 + $0x98] sm:$0xff]
      %v528 = vld [vmem:[#allocation2 + $0xa0] sm:$0xff]
      %v529 = vld [vmem:[#allocation2 + $0xa8] sm:$0xff]
      %v530 = vld [vmem:[#allocation2 + $0xb0] sm:$0xff]
      %v531 = vld [vmem:[#allocation2 + $0xb8] sm:$0xff]
      %v532 = vld [vmem:[#allocation2 + $0xc0] sm:$0xff]
      %v533 = vld [vmem:[#allocation2 + $0xc8] sm:$0xff]
      %v534 = vld [vmem:[#allocation2 + $0xd0] sm:$0xff]
      %v535 = vld [vmem:[#allocation2 + $0xd8] sm:$0xff]
      %v536 = vld [vmem:[#allocation2 + $0xe0] sm:$0xff]
      %v537 = vld [vmem:[#allocation2 + $0xe8] sm:$0xff]
      %v538 = vld [vmem:[#allocation2 + $0xf0] sm:$0xff]
      %v539 = vld [vmem:[#allocation2 + $0xf8] sm:$0xff]
      %v540 = vadd.f32 %v508, %v389
      %v541 = vadd.f32 %v509, %v391
      %v542 = vadd.f32 %v510, %v394
      %v543 = vadd.f32 %v511, %v396
      %v544 = vadd.f32 %v512, %v399
      %v545 = vadd.f32 %v513, %v401
      %v546 = vadd.f32 %v514, %v404
      %v547 = vadd.f32 %v515, %v406
      %v548 = vadd.f32 %v516, %v409
      %v549 = vadd.f32 %v517, %v411
      %v550 = vadd.f32 %v518, %v414
      %v551 = vadd.f32 %v519, %v416
      %v552 = vadd.f32 %v520, %v419
      %v553 = vadd.f32 %v521, %v421
      %v554 = vadd.f32 %v522, %v424
      %v555 = vadd.f32 %v523, %v426
      %v556 = vadd.f32 %v524, %v429
      %v557 = vadd.f32 %v525, %v431
      %v558 = vadd.f32 %v526, %v434
      %v559 = vadd.f32 %v527, %v436
      %v560 = vadd.f32 %v528, %v439
      %v561 = vadd.f32 %v529, %v441
      %v562 = vadd.f32 %v530, %v444
      %v563 = vadd.f32 %v531, %v446
      %v564 = vadd.f32 %v532, %v449
      %v565 = vadd.f32 %v533, %v451
      %v566 = vadd.f32 %v534, %v454
      %v567 = vadd.f32 %v535, %v456
      %v568 = vadd.f32 %v536, %v459
      %v569 = vadd.f32 %v537, %v461
      %v570 = vadd.f32 %v538, %v464
      %v571 = vadd.f32 %v539, %v466
      %572 = vst [vmem:[#allocation2] sm:$0xff] %v540
      %573 = vst [vmem:[#allocation2 + $0x8] sm:$0xff] %v541
      %574 = vst [vmem:[#allocation2 + $0x10] sm:$0xff] %v542
      %575 = vst [vmem:[#allocation2 + $0x18] sm:$0xff] %v543
      %576 = vst [vmem:[#allocation2 + $0x20] sm:$0xff] %v544
      %577 = vst [vmem:[#allocation2 + $0x28] sm:$0xff] %v545
      %578 = vst [vmem:[#allocation2 + $0x30] sm:$0xff] %v546
      %579 = vst [vmem:[#allocation2 + $0x38] sm:$0xff] %v547
      %580 = vst [vmem:[#allocation2 + $0x40] sm:$0xff] %v548
      %581 = vst [vmem:[#allocation2 + $0x48] sm:$0xff] %v549
      %582 = vst [vmem:[#allocation2 + $0x50] sm:$0xff] %v550
      %583 = vst [vmem:[#allocation2 + $0x58] sm:$0xff] %v551
      %584 = vst [vmem:[#allocation2 + $0x60] sm:$0xff] %v552
      %585 = vst [vmem:[#allocation2 + $0x68] sm:$0xff] %v553
      %586 = vst [vmem:[#allocation2 + $0x70] sm:$0xff] %v554
      %587 = vst [vmem:[#allocation2 + $0x78] sm:$0xff] %v555
      %588 = vst [vmem:[#allocation2 + $0x80] sm:$0xff] %v556
      %589 = vst [vmem:[#allocation2 + $0x88] sm:$0xff] %v557
      %590 = vst [vmem:[#allocation2 + $0x90] sm:$0xff] %v558
      %591 = vst [vmem:[#allocation2 + $0x98] sm:$0xff] %v559
      %592 = vst [vmem:[#allocation2 + $0xa0] sm:$0xff] %v560
      %593 = vst [vmem:[#allocation2 + $0xa8] sm:$0xff] %v561
      %594 = vst [vmem:[#allocation2 + $0xb0] sm:$0xff] %v562
      %595 = vst [vmem:[#allocation2 + $0xb8] sm:$0xff] %v563
      %596 = vst [vmem:[#allocation2 + $0xc0] sm:$0xff] %v564
      %597 = vst [vmem:[#allocation2 + $0xc8] sm:$0xff] %v565
      %598 = vst [vmem:[#allocation2 + $0xd0] sm:$0xff] %v566
      %599 = vst [vmem:[#allocation2 + $0xd8] sm:$0xff] %v567
      %600 = vst [vmem:[#allocation2 + $0xe0] sm:$0xff] %v568
      %601 = vst [vmem:[#allocation2 + $0xe8] sm:$0xff] %v569
      %602 = vst [vmem:[#allocation2 + $0xf0] sm:$0xff] %v570
      %603 = vst [vmem:[#allocation2 + $0xf8] sm:$0xff] %v571
    $region53: #{tpu_custom_call.1} parent=1 // pred_fallthru
      _
    // Predicated region
    $region54: #{tpu_custom_call.1} parent=1 // pred_check
      %p604 = pneg %p468
    $region55: #{tpu_custom_call.1} parent=1 // pred_check_branch
      %606 = sbr.rel (%p604) target = $region57
    $region56: #{tpu_custom_call.1} parent=1 // pred_region
      %v607 = vld [vmem:[#allocation2] sm:$0xff]
      %v608 = vld [vmem:[#allocation2 + $0x8] sm:$0xff]
      %v609 = vld [vmem:[#allocation2 + $0x10] sm:$0xff]
      %v610 = vld [vmem:[#allocation2 + $0x18] sm:$0xff]
      %v611 = vld [vmem:[#allocation2 + $0x20] sm:$0xff]
      %v612 = vld [vmem:[#allocation2 + $0x28] sm:$0xff]
      %v613 = vld [vmem:[#allocation2 + $0x30] sm:$0xff]
      %v614 = vld [vmem:[#allocation2 + $0x38] sm:$0xff]
      %v615 = vld [vmem:[#allocation2 + $0x40] sm:$0xff]
      %v616 = vld [vmem:[#allocation2 + $0x48] sm:$0xff]
      %v617 = vld [vmem:[#allocation2 + $0x50] sm:$0xff]
      %v618 = vld [vmem:[#allocation2 + $0x58] sm:$0xff]
      %v619 = vld [vmem:[#allocation2 + $0x60] sm:$0xff]
      %v620 = vld [vmem:[#allocation2 + $0x68] sm:$0xff]
      %v621 = vld [vmem:[#allocation2 + $0x70] sm:$0xff]
      %v622 = vld [vmem:[#allocation2 + $0x78] sm:$0xff]
      %v623 = vld [vmem:[#allocation2 + $0x80] sm:$0xff]
      %v624 = vld [vmem:[#allocation2 + $0x88] sm:$0xff]
      %v625 = vld [vmem:[#allocation2 + $0x90] sm:$0xff]
      %v626 = vld [vmem:[#allocation2 + $0x98] sm:$0xff]
      %v627 = vld [vmem:[#allocation2 + $0xa0] sm:$0xff]
      %v628 = vld [vmem:[#allocation2 + $0xa8] sm:$0xff]
      %v629 = vld [vmem:[#allocation2 + $0xb0] sm:$0xff]
      %v630 = vld [vmem:[#allocation2 + $0xb8] sm:$0xff]
      %v631 = vld [vmem:[#allocation2 + $0xc0] sm:$0xff]
      %v632 = vld [vmem:[#allocation2 + $0xc8] sm:$0xff]
      %v633 = vld [vmem:[#allocation2 + $0xd0] sm:$0xff]
      %v634 = vld [vmem:[#allocation2 + $0xd8] sm:$0xff]
      %v635 = vld [vmem:[#allocation2 + $0xe0] sm:$0xff]
      %v636 = vld [vmem:[#allocation2 + $0xe8] sm:$0xff]
      %v637 = vld [vmem:[#allocation2 + $0xf0] sm:$0xff]
      %v638 = vld [vmem:[#allocation2 + $0xf8] sm:$0xff]
      %v639 = vld [vmem:[%s2] sm:$0x1]
      %v641 = vperm.slane %v639, 0
      %v643 = vadd.f32 %v607, %v641
      %v644 = vadd.f32 %v608, %v641
      %v645 = vadd.f32 %v609, %v641
      %v646 = vadd.f32 %v610, %v641
      %v647 = vadd.f32 %v611, %v641
      %v648 = vadd.f32 %v612, %v641
      %v649 = vadd.f32 %v613, %v641
      %v650 = vadd.f32 %v614, %v641
      %v651 = vadd.f32 %v615, %v641
      %v652 = vadd.f32 %v616, %v641
      %v653 = vadd.f32 %v617, %v641
      %v654 = vadd.f32 %v618, %v641
      %v655 = vadd.f32 %v619, %v641
      %v656 = vadd.f32 %v620, %v641
      %v657 = vadd.f32 %v621, %v641
      %v658 = vadd.f32 %v622, %v641
      %v659 = vadd.f32 %v623, %v641
      %v660 = vadd.f32 %v624, %v641
      %v661 = vadd.f32 %v625, %v641
      %v662 = vadd.f32 %v626, %v641
      %v663 = vadd.f32 %v627, %v641
      %v664 = vadd.f32 %v628, %v641
      %v665 = vadd.f32 %v629, %v641
      %v666 = vadd.f32 %v630, %v641
      %v667 = vadd.f32 %v631, %v641
      %v668 = vadd.f32 %v632, %v641
      %v669 = vadd.f32 %v633, %v641
      %v670 = vadd.f32 %v634, %v641
      %v671 = vadd.f32 %v635, %v641
      %v672 = vadd.f32 %v636, %v641
      %v673 = vadd.f32 %v637, %v641
      %v674 = vadd.f32 %v638, %v641
      %v675 = vmax.f32 %v643, 0.0
      %v676 = vmax.f32 %v644, 0.0
      %v677 = vmax.f32 %v645, 0.0
      %v678 = vmax.f32 %v646, 0.0
      %v679 = vmax.f32 %v647, 0.0
      %v680 = vmax.f32 %v648, 0.0
      %v681 = vmax.f32 %v649, 0.0
      %v682 = vmax.f32 %v650, 0.0
      %v683 = vmax.f32 %v651, 0.0
      %v684 = vmax.f32 %v652, 0.0
      %v685 = vmax.f32 %v653, 0.0
      %v686 = vmax.f32 %v654, 0.0
      %v687 = vmax.f32 %v655, 0.0
      %v688 = vmax.f32 %v656, 0.0
      %v689 = vmax.f32 %v657, 0.0
      %v690 = vmax.f32 %v658, 0.0
      %v691 = vmax.f32 %v659, 0.0
      %v692 = vmax.f32 %v660, 0.0
      %v693 = vmax.f32 %v661, 0.0
      %v694 = vmax.f32 %v662, 0.0
      %v695 = vmax.f32 %v663, 0.0
      %v696 = vmax.f32 %v664, 0.0
      %v697 = vmax.f32 %v665, 0.0
      %v698 = vmax.f32 %v666, 0.0
      %v699 = vmax.f32 %v667, 0.0
      %v700 = vmax.f32 %v668, 0.0
      %v701 = vmax.f32 %v669, 0.0
      %v702 = vmax.f32 %v670, 0.0
      %v703 = vmax.f32 %v671, 0.0
      %v704 = vmax.f32 %v672, 0.0
      %v705 = vmax.f32 %v673, 0.0
      %v706 = vmax.f32 %v674, 0.0
      %v707 = vpack.c.bf16 %v676, %v675
      %v708 = vpack.c.bf16 %v678, %v677
      %v709 = vpack.c.bf16 %v680, %v679
      %v710 = vpack.c.bf16 %v682, %v681
      %v711 = vpack.c.bf16 %v684, %v683
      %v712 = vpack.c.bf16 %v686, %v685
      %v713 = vpack.c.bf16 %v688, %v687
      %v714 = vpack.c.bf16 %v690, %v689
      %v715 = vpack.c.bf16 %v692, %v691
      %v716 = vpack.c.bf16 %v694, %v693
      %v717 = vpack.c.bf16 %v696, %v695
      %v718 = vpack.c.bf16 %v698, %v697
      %v719 = vpack.c.bf16 %v700, %v699
      %v720 = vpack.c.bf16 %v702, %v701
      %v721 = vpack.c.bf16 %v704, %v703
      %v722 = vpack.c.bf16 %v706, %v705
      %v723 = vld [vmem:[%s3] sm:$0xf]
      %v724 = vld [vmem:[%s3 + $0x4] sm:$0xf]
      %v725 = vld [vmem:[%s3 + $0x8] sm:$0xf]
      %v726 = vld [vmem:[%s3 + $0xc] sm:$0xf]
      %v727 = vld [vmem:[%s3 + $0x10] sm:$0xf]
      %v728 = vld [vmem:[%s3 + $0x14] sm:$0xf]
      %v729 = vld [vmem:[%s3 + $0x18] sm:$0xf]
      %v730 = vld [vmem:[%s3 + $0x1c] sm:$0xf]
      %v731 = vld [vmem:[%s3 + $0x20] sm:$0xf]
      %v732 = vld [vmem:[%s3 + $0x24] sm:$0xf]
      %v733 = vld [vmem:[%s3 + $0x28] sm:$0xf]
      %v734 = vld [vmem:[%s3 + $0x2c] sm:$0xf]
      %v735 = vld [vmem:[%s3 + $0x30] sm:$0xf]
      %v736 = vld [vmem:[%s3 + $0x34] sm:$0xf]
      %v737 = vld [vmem:[%s3 + $0x38] sm:$0xf]
      %v738 = vld [vmem:[%s3 + $0x3c] sm:$0xf]
      %v739 = vld [vmem:[%s4] sm:$0x1]
      %v741 = vperm.slane %v739, 0
      %v759 = vunpack.c.l.b16 %v723
      %v760 = vunpack.c.l.b16 %v724
      %v761 = vunpack.c.l.b16 %v725
      %v762 = vunpack.c.l.b16 %v726
      %v763 = vunpack.c.l.b16 %v727
      %v764 = vunpack.c.l.b16 %v728
      %v765 = vunpack.c.l.b16 %v729
      %v766 = vunpack.c.l.b16 %v730
      %v767 = vunpack.c.l.b16 %v731
      %v768 = vunpack.c.l.b16 %v732
      %v769 = vunpack.c.l.b16 %v733
      %v770 = vunpack.c.l.b16 %v734
      %v771 = vunpack.c.l.b16 %v735
      %v772 = vunpack.c.l.b16 %v736
      %v773 = vunpack.c.l.b16 %v737
      %v774 = vunpack.c.l.b16 %v738
      %v775 = vpack.c.b16 %v760, %v759
      %v776 = vpack.c.b16 %v762, %v761
      %v777 = vpack.c.b16 %v764, %v763
      %v778 = vpack.c.b16 %v766, %v765
      %v779 = vpack.c.b16 %v768, %v767
      %v780 = vpack.c.b16 %v770, %v769
      %v781 = vpack.c.b16 %v772, %v771
      %v782 = vpack.c.b16 %v774, %v773
      %791 = vmatpush.bf16.msra.mxu0 %v782
      %792 = vmatpush.bf16.msra.mxu0 %v781
      %793 = vmatpush.bf16.msra.mxu0 %v780
      %794 = vmatpush.bf16.msra.mxu0 %v779
      %795 = vmatpush.bf16.msra.mxu0 %v778
      %796 = vmatpush.bf16.msra.mxu0 %v777
      %797 = vmatpush.bf16.msra.mxu0 %v776
      %798 = vmatpush.bf16.msra.mxu0 %v775
      %799 = vmatmul.bf16.gmra.mxu0 %v707
      %v800 = vpop.f32.mrf.mxu0
      %v801 = vadd.f32 %v741, %v800
      %v802 = vpop.f32.mrf.mxu0
      %v803 = vadd.f32 %v741, %v802
      %804 = vmatmul.bf16.gmra.mxu0 %v708
      %v805 = vpop.f32.mrf.mxu0
      %v806 = vadd.f32 %v741, %v805
      %v807 = vpop.f32.mrf.mxu0
      %v808 = vadd.f32 %v741, %v807
      %809 = vmatmul.bf16.gmra.mxu0 %v709
      %v810 = vpop.f32.mrf.mxu0
      %v811 = vadd.f32 %v741, %v810
      %v812 = vpop.f32.mrf.mxu0
      %v813 = vadd.f32 %v741, %v812
      %814 = vmatmul.bf16.gmra.mxu0 %v710
      %v815 = vpop.f32.mrf.mxu0
      %v816 = vadd.f32 %v741, %v815
      %v817 = vpop.f32.mrf.mxu0
      %v818 = vadd.f32 %v741, %v817
      %819 = vmatmul.bf16.gmra.mxu0 %v711
      %v820 = vpop.f32.mrf.mxu0
      %v821 = vadd.f32 %v741, %v820
      %v822 = vpop.f32.mrf.mxu0
      %v823 = vadd.f32 %v741, %v822
      %824 = vmatmul.bf16.gmra.mxu0 %v712
      %v825 = vpop.f32.mrf.mxu0
      %v826 = vadd.f32 %v741, %v825
      %v827 = vpop.f32.mrf.mxu0
      %v828 = vadd.f32 %v741, %v827
      %829 = vmatmul.bf16.gmra.mxu0 %v713
      %v830 = vpop.f32.mrf.mxu0
      %v831 = vadd.f32 %v741, %v830
      %v832 = vpop.f32.mrf.mxu0
      %v833 = vadd.f32 %v741, %v832
      %834 = vmatmul.bf16.gmra.mxu0 %v714
      %v835 = vpop.f32.mrf.mxu0
      %v836 = vadd.f32 %v741, %v835
      %v837 = vpop.f32.mrf.mxu0
      %v838 = vadd.f32 %v741, %v837
      %839 = vmatmul.bf16.gmra.mxu0 %v715
      %v840 = vpop.f32.mrf.mxu0
      %v841 = vadd.f32 %v741, %v840
      %v842 = vpop.f32.mrf.mxu0
      %v843 = vadd.f32 %v741, %v842
      %844 = vmatmul.bf16.gmra.mxu0 %v716
      %v845 = vpop.f32.mrf.mxu0
      %v846 = vadd.f32 %v741, %v845
      %v847 = vpop.f32.mrf.mxu0
      %v848 = vadd.f32 %v741, %v847
      %849 = vmatmul.bf16.gmra.mxu0 %v717
      %v850 = vpop.f32.mrf.mxu0
      %v851 = vadd.f32 %v741, %v850
      %v852 = vpop.f32.mrf.mxu0
      %v853 = vadd.f32 %v741, %v852
      %854 = vmatmul.bf16.gmra.mxu0 %v718
      %v855 = vpop.f32.mrf.mxu0
      %v856 = vadd.f32 %v741, %v855
      %v857 = vpop.f32.mrf.mxu0
      %v858 = vadd.f32 %v741, %v857
      %859 = vmatmul.bf16.gmra.mxu0 %v719
      %v860 = vpop.f32.mrf.mxu0
      %v861 = vadd.f32 %v741, %v860
      %v862 = vpop.f32.mrf.mxu0
      %v863 = vadd.f32 %v741, %v862
      %864 = vmatmul.bf16.gmra.mxu0 %v720
      %v865 = vpop.f32.mrf.mxu0
      %v866 = vadd.f32 %v741, %v865
      %v867 = vpop.f32.mrf.mxu0
      %v868 = vadd.f32 %v741, %v867
      %869 = vmatmul.bf16.gmra.mxu0 %v721
      %v870 = vpop.f32.mrf.mxu0
      %v871 = vadd.f32 %v741, %v870
      %v872 = vpop.f32.mrf.mxu0
      %v873 = vadd.f32 %v741, %v872
      %874 = vmatmul.bf16.gmra.mxu0 %v722
      %v875 = vpop.f32.mrf.mxu0
      %v876 = vadd.f32 %v741, %v875
      %v877 = vpop.f32.mrf.mxu0
      %v878 = vadd.f32 %v741, %v877
      %879 = vdwg.mxu0
      %v880 = vmax.f32 %v801, 0.0
      %v881 = vmax.f32 %v803, 0.0
      %v882 = vmax.f32 %v806, 0.0
      %v883 = vmax.f32 %v808, 0.0
      %v884 = vmax.f32 %v811, 0.0
      %v885 = vmax.f32 %v813, 0.0
      %v886 = vmax.f32 %v816, 0.0
      %v887 = vmax.f32 %v818, 0.0
      %v888 = vmax.f32 %v821, 0.0
      %v889 = vmax.f32 %v823, 0.0
      %v890 = vmax.f32 %v826, 0.0
      %v891 = vmax.f32 %v828, 0.0
      %v892 = vmax.f32 %v831, 0.0
      %v893 = vmax.f32 %v833, 0.0
      %v894 = vmax.f32 %v836, 0.0
      %v895 = vmax.f32 %v838, 0.0
      %v896 = vmax.f32 %v841, 0.0
      %v897 = vmax.f32 %v843, 0.0
      %v898 = vmax.f32 %v846, 0.0
      %v899 = vmax.f32 %v848, 0.0
      %v900 = vmax.f32 %v851, 0.0
      %v901 = vmax.f32 %v853, 0.0
      %v902 = vmax.f32 %v856, 0.0
      %v903 = vmax.f32 %v858, 0.0
      %v904 = vmax.f32 %v861, 0.0
      %v905 = vmax.f32 %v863, 0.0
      %v906 = vmax.f32 %v866, 0.0
      %v907 = vmax.f32 %v868, 0.0
      %v908 = vmax.f32 %v871, 0.0
      %v909 = vmax.f32 %v873, 0.0
      %v910 = vmax.f32 %v876, 0.0
      %v911 = vmax.f32 %v878, 0.0
      %v912 = vpack.c.bf16 %v881, %v880
      %v913 = vpack.c.bf16 %v883, %v882
      %v914 = vpack.c.bf16 %v885, %v884
      %v915 = vpack.c.bf16 %v887, %v886
      %v916 = vpack.c.bf16 %v889, %v888
      %v917 = vpack.c.bf16 %v891, %v890
      %v918 = vpack.c.bf16 %v893, %v892
      %v919 = vpack.c.bf16 %v895, %v894
      %v920 = vpack.c.bf16 %v897, %v896
      %v921 = vpack.c.bf16 %v899, %v898
      %v922 = vpack.c.bf16 %v901, %v900
      %v923 = vpack.c.bf16 %v903, %v902
      %v924 = vpack.c.bf16 %v905, %v904
      %v925 = vpack.c.bf16 %v907, %v906
      %v926 = vpack.c.bf16 %v909, %v908
      %v927 = vpack.c.bf16 %v911, %v910
      %v928 = vld [vmem:[%s5] sm:$0xf]
      %v929 = vld [vmem:[%s5 + $0x4] sm:$0xf]
      %v930 = vld [vmem:[%s5 + $0x8] sm:$0xf]
      %v931 = vld [vmem:[%s5 + $0xc] sm:$0xf]
      %v932 = vld [vmem:[%s5 + $0x10] sm:$0xf]
      %v933 = vld [vmem:[%s5 + $0x14] sm:$0xf]
      %v934 = vld [vmem:[%s5 + $0x18] sm:$0xf]
      %v935 = vld [vmem:[%s5 + $0x1c] sm:$0xf]
      %v936 = vld [vmem:[%s6] sm:$0x1]
      %v938 = vperm.slane %v936, 0
      %v948 = vunpack.c.l.b16 %v928
      %v949 = vunpack.c.l.b16 %v929
      %v950 = vunpack.c.l.b16 %v930
      %v951 = vunpack.c.l.b16 %v931
      %v952 = vunpack.c.l.b16 %v932
      %v953 = vunpack.c.l.b16 %v933
      %v954 = vunpack.c.l.b16 %v934
      %v955 = vunpack.c.l.b16 %v935
      %v956 = vpack.c.b16 %v949, %v948
      %v957 = vpack.c.b16 %v951, %v950
      %v958 = vpack.c.b16 %v953, %v952
      %v959 = vpack.c.b16 %v955, %v954
      %vm964 = vcmask 523264
      %v966 = vsel %vm964, %v912, 0
      %v969 = vsel %vm964, %v913, 0
      %v972 = vsel %vm964, %v914, 0
      %v975 = vsel %vm964, %v915, 0
      %v978 = vsel %vm964, %v916, 0
      %v981 = vsel %vm964, %v917, 0
      %v984 = vsel %vm964, %v918, 0
      %v987 = vsel %vm964, %v919, 0
      %v990 = vsel %vm964, %v920, 0
      %v993 = vsel %vm964, %v921, 0
      %v996 = vsel %vm964, %v922, 0
      %v999 = vsel %vm964, %v923, 0
      %v1002 = vsel %vm964, %v924, 0
      %v1005 = vsel %vm964, %v925, 0
      %v1008 = vsel %vm964, %v926, 0
      %v1011 = vsel %vm964, %v927, 0
      %1013 = vmatpush.bf16.msra.mxu0 0
      %1014 = vmatpush.bf16.msra.mxu0 0
      %1015 = vmatpush.bf16.msra.mxu0 0
      %1016 = vmatpush.bf16.msra.mxu0 0
      %1017 = vmatpush.bf16.msra.mxu0 %v959
      %1018 = vmatpush.bf16.msra.mxu0 %v958
      %1019 = vmatpush.bf16.msra.mxu0 %v957
      %1020 = vmatpush.bf16.msra.mxu0 %v956
      %1021 = vmatmul.bf16.gmra.mxu0 %v966
      %v1022 = vpop.f32.mrf.mxu0
      %v1023 = vadd.f32 %v938, %v1022
      %v1024 = vpop.f32.mrf.mxu0
      %v1025 = vadd.f32 %v938, %v1024
      %1026 = vmatmul.bf16.gmra.mxu0 %v969
      %v1027 = vpop.f32.mrf.mxu0
      %v1028 = vadd.f32 %v938, %v1027
      %v1029 = vpop.f32.mrf.mxu0
      %v1030 = vadd.f32 %v938, %v1029
      %1031 = vmatmul.bf16.gmra.mxu0 %v972
      %v1032 = vpop.f32.mrf.mxu0
      %v1033 = vadd.f32 %v938, %v1032
      %v1034 = vpop.f32.mrf.mxu0
      %v1035 = vadd.f32 %v938, %v1034
      %1036 = vmatmul.bf16.gmra.mxu0 %v975
      %v1037 = vpop.f32.mrf.mxu0
      %v1038 = vadd.f32 %v938, %v1037
      %v1039 = vpop.f32.mrf.mxu0
      %v1040 = vadd.f32 %v938, %v1039
      %1041 = vmatmul.bf16.gmra.mxu0 %v978
      %v1042 = vpop.f32.mrf.mxu0
      %v1043 = vadd.f32 %v938, %v1042
      %v1044 = vpop.f32.mrf.mxu0
      %v1045 = vadd.f32 %v938, %v1044
      %1046 = vmatmul.bf16.gmra.mxu0 %v981
      %v1047 = vpop.f32.mrf.mxu0
      %v1048 = vadd.f32 %v938, %v1047
      %v1049 = vpop.f32.mrf.mxu0
      %v1050 = vadd.f32 %v938, %v1049
      %1051 = vmatmul.bf16.gmra.mxu0 %v984
      %v1052 = vpop.f32.mrf.mxu0
      %v1053 = vadd.f32 %v938, %v1052
      %v1054 = vpop.f32.mrf.mxu0
      %v1055 = vadd.f32 %v938, %v1054
      %1056 = vmatmul.bf16.gmra.mxu0 %v987
      %v1057 = vpop.f32.mrf.mxu0
      %v1058 = vadd.f32 %v938, %v1057
      %v1059 = vpop.f32.mrf.mxu0
      %v1060 = vadd.f32 %v938, %v1059
      %1061 = vmatmul.bf16.gmra.mxu0 %v990
      %v1062 = vpop.f32.mrf.mxu0
      %v1063 = vadd.f32 %v938, %v1062
      %v1064 = vpop.f32.mrf.mxu0
      %v1065 = vadd.f32 %v938, %v1064
      %1066 = vmatmul.bf16.gmra.mxu0 %v993
      %v1067 = vpop.f32.mrf.mxu0
      %v1068 = vadd.f32 %v938, %v1067
      %v1069 = vpop.f32.mrf.mxu0
      %v1070 = vadd.f32 %v938, %v1069
      %1071 = vmatmul.bf16.gmra.mxu0 %v996
      %v1072 = vpop.f32.mrf.mxu0
      %v1073 = vadd.f32 %v938, %v1072
      %v1074 = vpop.f32.mrf.mxu0
      %v1075 = vadd.f32 %v938, %v1074
      %1076 = vmatmul.bf16.gmra.mxu0 %v999
      %v1077 = vpop.f32.mrf.mxu0
      %v1078 = vadd.f32 %v938, %v1077
      %v1079 = vpop.f32.mrf.mxu0
      %v1080 = vadd.f32 %v938, %v1079
      %1081 = vmatmul.bf16.gmra.mxu0 %v1002
      %v1082 = vpop.f32.mrf.mxu0
      %v1083 = vadd.f32 %v938, %v1082
      %v1084 = vpop.f32.mrf.mxu0
      %v1085 = vadd.f32 %v938, %v1084
      %1086 = vmatmul.bf16.gmra.mxu0 %v1005
      %v1087 = vpop.f32.mrf.mxu0
      %v1088 = vadd.f32 %v938, %v1087
      %v1089 = vpop.f32.mrf.mxu0
      %v1090 = vadd.f32 %v938, %v1089
      %1091 = vmatmul.bf16.gmra.mxu0 %v1008
      %v1092 = vpop.f32.mrf.mxu0
      %v1093 = vadd.f32 %v938, %v1092
      %v1094 = vpop.f32.mrf.mxu0
      %v1095 = vadd.f32 %v938, %v1094
      %1096 = vmatmul.bf16.gmra.mxu0 %v1011
      %v1097 = vpop.f32.mrf.mxu0
      %v1098 = vadd.f32 %v938, %v1097
      %v1099 = vpop.f32.mrf.mxu0
      %v1100 = vadd.f32 %v938, %v1099
      %1101 = vdwg.mxu0
      %1102 = vadd.xlane.f32.xlu0 %v1023
      %v1103 = vpop.xlane.xlu0 %1102
      %1104 = vadd.xlane.f32.xlu0 %v1025
      %v1105 = vpop.xlane.xlu0 %1104
      %1106 = vadd.xlane.f32.xlu0 %v1028
      %v1107 = vpop.xlane.xlu0 %1106
      %1108 = vadd.xlane.f32.xlu0 %v1030
      %v1109 = vpop.xlane.xlu0 %1108
      %1110 = vadd.xlane.f32.xlu0 %v1033
      %v1111 = vpop.xlane.xlu0 %1110
      %1112 = vadd.xlane.f32.xlu0 %v1035
      %v1113 = vpop.xlane.xlu0 %1112
      %1114 = vadd.xlane.f32.xlu0 %v1038
      %v1115 = vpop.xlane.xlu0 %1114
      %1116 = vadd.xlane.f32.xlu0 %v1040
      %v1117 = vpop.xlane.xlu0 %1116
      %1118 = vadd.xlane.f32.xlu0 %v1043
      %v1119 = vpop.xlane.xlu0 %1118
      %1120 = vadd.xlane.f32.xlu0 %v1045
      %v1121 = vpop.xlane.xlu0 %1120
      %1122 = vadd.xlane.f32.xlu0 %v1048
      %v1123 = vpop.xlane.xlu0 %1122
      %1124 = vadd.xlane.f32.xlu0 %v1050
      %v1125 = vpop.xlane.xlu0 %1124
      %1126 = vadd.xlane.f32.xlu0 %v1053
      %v1127 = vpop.xlane.xlu0 %1126
      %1128 = vadd.xlane.f32.xlu0 %v1055
      %v1129 = vpop.xlane.xlu0 %1128
      %1130 = vadd.xlane.f32.xlu0 %v1058
      %v1131 = vpop.xlane.xlu0 %1130
      %1132 = vadd.xlane.f32.xlu0 %v1060
      %v1133 = vpop.xlane.xlu0 %1132
      %1134 = vadd.xlane.f32.xlu0 %v1063
      %v1135 = vpop.xlane.xlu0 %1134
      %1136 = vadd.xlane.f32.xlu0 %v1065
      %v1137 = vpop.xlane.xlu0 %1136
      %1138 = vadd.xlane.f32.xlu0 %v1068
      %v1139 = vpop.xlane.xlu0 %1138
      %1140 = vadd.xlane.f32.xlu0 %v1070
      %v1141 = vpop.xlane.xlu0 %1140
      %1142 = vadd.xlane.f32.xlu0 %v1073
      %v1143 = vpop.xlane.xlu0 %1142
      %1144 = vadd.xlane.f32.xlu0 %v1075
      %v1145 = vpop.xlane.xlu0 %1144
      %1146 = vadd.xlane.f32.xlu0 %v1078
      %v1147 = vpop.xlane.xlu0 %1146
      %1148 = vadd.xlane.f32.xlu0 %v1080
      %v1149 = vpop.xlane.xlu0 %1148
      %1150 = vadd.xlane.f32.xlu0 %v1083
      %v1151 = vpop.xlane.xlu0 %1150
      %1152 = vadd.xlane.f32.xlu0 %v1085
      %v1153 = vpop.xlane.xlu0 %1152
      %1154 = vadd.xlane.f32.xlu0 %v1088
      %v1155 = vpop.xlane.xlu0 %1154
      %1156 = vadd.xlane.f32.xlu0 %v1090
      %v1157 = vpop.xlane.xlu0 %1156
      %1158 = vadd.xlane.f32.xlu0 %v1093
      %v1159 = vpop.xlane.xlu0 %1158
      %1160 = vadd.xlane.f32.xlu0 %v1095
      %v1161 = vpop.xlane.xlu0 %1160
      %1162 = vadd.xlane.f32.xlu0 %v1098
      %v1163 = vpop.xlane.xlu0 %1162
      %1164 = vadd.xlane.f32.xlu0 %v1100
      %v1165 = vpop.xlane.xlu0 %1164
      %v1166 = vmul.f32 %v1103, 0.03125
      %v1167 = vmul.f32 %v1105, 0.03125
      %v1168 = vmul.f32 %v1107, 0.03125
      %v1169 = vmul.f32 %v1109, 0.03125
      %v1170 = vmul.f32 %v1111, 0.03125
      %v1171 = vmul.f32 %v1113, 0.03125
      %v1172 = vmul.f32 %v1115, 0.03125
      %v1173 = vmul.f32 %v1117, 0.03125
      %v1174 = vmul.f32 %v1119, 0.03125
      %v1175 = vmul.f32 %v1121, 0.03125
      %v1176 = vmul.f32 %v1123, 0.03125
      %v1177 = vmul.f32 %v1125, 0.03125
      %v1178 = vmul.f32 %v1127, 0.03125
      %v1179 = vmul.f32 %v1129, 0.03125
      %v1180 = vmul.f32 %v1131, 0.03125
      %v1181 = vmul.f32 %v1133, 0.03125
      %v1182 = vmul.f32 %v1135, 0.03125
      %v1183 = vmul.f32 %v1137, 0.03125
      %v1184 = vmul.f32 %v1139, 0.03125
      %v1185 = vmul.f32 %v1141, 0.03125
      %v1186 = vmul.f32 %v1143, 0.03125
      %v1187 = vmul.f32 %v1145, 0.03125
      %v1188 = vmul.f32 %v1147, 0.03125
      %v1189 = vmul.f32 %v1149, 0.03125
      %v1190 = vmul.f32 %v1151, 0.03125
      %v1191 = vmul.f32 %v1153, 0.03125
      %v1192 = vmul.f32 %v1155, 0.03125
      %v1193 = vmul.f32 %v1157, 0.03125
      %v1194 = vmul.f32 %v1159, 0.03125
      %v1195 = vmul.f32 %v1161, 0.03125
      %v1196 = vmul.f32 %v1163, 0.03125
      %v1197 = vmul.f32 %v1165, 0.03125
      %v1198 = vsub.f32 %v1023, %v1166
      %v1199 = vsub.f32 %v1025, %v1167
      %v1200 = vsub.f32 %v1028, %v1168
      %v1201 = vsub.f32 %v1030, %v1169
      %v1202 = vsub.f32 %v1033, %v1170
      %v1203 = vsub.f32 %v1035, %v1171
      %v1204 = vsub.f32 %v1038, %v1172
      %v1205 = vsub.f32 %v1040, %v1173
      %v1206 = vsub.f32 %v1043, %v1174
      %v1207 = vsub.f32 %v1045, %v1175
      %v1208 = vsub.f32 %v1048, %v1176
      %v1209 = vsub.f32 %v1050, %v1177
      %v1210 = vsub.f32 %v1053, %v1178
      %v1211 = vsub.f32 %v1055, %v1179
      %v1212 = vsub.f32 %v1058, %v1180
      %v1213 = vsub.f32 %v1060, %v1181
      %v1214 = vsub.f32 %v1063, %v1182
      %v1215 = vsub.f32 %v1065, %v1183
      %v1216 = vsub.f32 %v1068, %v1184
      %v1217 = vsub.f32 %v1070, %v1185
      %v1218 = vsub.f32 %v1073, %v1186
      %v1219 = vsub.f32 %v1075, %v1187
      %v1220 = vsub.f32 %v1078, %v1188
      %v1221 = vsub.f32 %v1080, %v1189
      %v1222 = vsub.f32 %v1083, %v1190
      %v1223 = vsub.f32 %v1085, %v1191
      %v1224 = vsub.f32 %v1088, %v1192
      %v1225 = vsub.f32 %v1090, %v1193
      %v1226 = vsub.f32 %v1093, %v1194
      %v1227 = vsub.f32 %v1095, %v1195
      %v1228 = vsub.f32 %v1098, %v1196
      %v1229 = vsub.f32 %v1100, %v1197
      %v1230 = vlaneseq
      %v1231 = vand.u32 %v1230, 127
      %vm1232 = vcmp.lt.s32.totalorder %v1231, 32
      %v1233 = vsel %vm1232, %v1198, 0.0
      %v1234 = vsel %vm1232, %v1199, 0.0
      %v1235 = vsel %vm1232, %v1200, 0.0
      %v1236 = vsel %vm1232, %v1201, 0.0
      %v1237 = vsel %vm1232, %v1202, 0.0
      %v1238 = vsel %vm1232, %v1203, 0.0
      %v1239 = vsel %vm1232, %v1204, 0.0
      %v1240 = vsel %vm1232, %v1205, 0.0
      %v1241 = vsel %vm1232, %v1206, 0.0
      %v1242 = vsel %vm1232, %v1207, 0.0
      %v1243 = vsel %vm1232, %v1208, 0.0
      %v1244 = vsel %vm1232, %v1209, 0.0
      %v1245 = vsel %vm1232, %v1210, 0.0
      %v1246 = vsel %vm1232, %v1211, 0.0
      %v1247 = vsel %vm1232, %v1212, 0.0
      %v1248 = vsel %vm1232, %v1213, 0.0
      %v1249 = vsel %vm1232, %v1214, 0.0
      %v1250 = vsel %vm1232, %v1215, 0.0
      %v1251 = vsel %vm1232, %v1216, 0.0
      %v1252 = vsel %vm1232, %v1217, 0.0
      %v1253 = vsel %vm1232, %v1218, 0.0
      %v1254 = vsel %vm1232, %v1219, 0.0
      %v1255 = vsel %vm1232, %v1220, 0.0
      %v1256 = vsel %vm1232, %v1221, 0.0
      %v1257 = vsel %vm1232, %v1222, 0.0
      %v1258 = vsel %vm1232, %v1223, 0.0
      %v1259 = vsel %vm1232, %v1224, 0.0
      %v1260 = vsel %vm1232, %v1225, 0.0
      %v1261 = vsel %vm1232, %v1226, 0.0
      %v1262 = vsel %vm1232, %v1227, 0.0
      %v1263 = vsel %vm1232, %v1228, 0.0
      %v1264 = vsel %vm1232, %v1229, 0.0
      %v1265 = vmul.f32 %v1233, %v1233
      %v1266 = vmul.f32 %v1234, %v1234
      %v1267 = vmul.f32 %v1235, %v1235
      %v1268 = vmul.f32 %v1236, %v1236
      %v1269 = vmul.f32 %v1237, %v1237
      %v1270 = vmul.f32 %v1238, %v1238
      %v1271 = vmul.f32 %v1239, %v1239
      %v1272 = vmul.f32 %v1240, %v1240
      %v1273 = vmul.f32 %v1241, %v1241
      %v1274 = vmul.f32 %v1242, %v1242
      %v1275 = vmul.f32 %v1243, %v1243
      %v1276 = vmul.f32 %v1244, %v1244
      %v1277 = vmul.f32 %v1245, %v1245
      %v1278 = vmul.f32 %v1246, %v1246
      %v1279 = vmul.f32 %v1247, %v1247
      %v1280 = vmul.f32 %v1248, %v1248
      %v1281 = vmul.f32 %v1249, %v1249
      %v1282 = vmul.f32 %v1250, %v1250
      %v1283 = vmul.f32 %v1251, %v1251
      %v1284 = vmul.f32 %v1252, %v1252
      %v1285 = vmul.f32 %v1253, %v1253
      %v1286 = vmul.f32 %v1254, %v1254
      %v1287 = vmul.f32 %v1255, %v1255
      %v1288 = vmul.f32 %v1256, %v1256
      %v1289 = vmul.f32 %v1257, %v1257
      %v1290 = vmul.f32 %v1258, %v1258
      %v1291 = vmul.f32 %v1259, %v1259
      %v1292 = vmul.f32 %v1260, %v1260
      %v1293 = vmul.f32 %v1261, %v1261
      %v1294 = vmul.f32 %v1262, %v1262
      %v1295 = vmul.f32 %v1263, %v1263
      %v1296 = vmul.f32 %v1264, %v1264
      %1297 = vadd.xlane.f32.xlu0 %v1265
      %v1298 = vpop.xlane.xlu0 %1297
      %1299 = vadd.xlane.f32.xlu0 %v1266
      %v1300 = vpop.xlane.xlu0 %1299
      %1301 = vadd.xlane.f32.xlu0 %v1267
      %v1302 = vpop.xlane.xlu0 %1301
      %1303 = vadd.xlane.f32.xlu0 %v1268
      %v1304 = vpop.xlane.xlu0 %1303
      %1305 = vadd.xlane.f32.xlu0 %v1269
      %v1306 = vpop.xlane.xlu0 %1305
      %1307 = vadd.xlane.f32.xlu0 %v1270
      %v1308 = vpop.xlane.xlu0 %1307
      %1309 = vadd.xlane.f32.xlu0 %v1271
      %v1310 = vpop.xlane.xlu0 %1309
      %1311 = vadd.xlane.f32.xlu0 %v1272
      %v1312 = vpop.xlane.xlu0 %1311
      %1313 = vadd.xlane.f32.xlu0 %v1273
      %v1314 = vpop.xlane.xlu0 %1313
      %1315 = vadd.xlane.f32.xlu0 %v1274
      %v1316 = vpop.xlane.xlu0 %1315
      %1317 = vadd.xlane.f32.xlu0 %v1275
      %v1318 = vpop.xlane.xlu0 %1317
      %1319 = vadd.xlane.f32.xlu0 %v1276
      %v1320 = vpop.xlane.xlu0 %1319
      %1321 = vadd.xlane.f32.xlu0 %v1277
      %v1322 = vpop.xlane.xlu0 %1321
      %1323 = vadd.xlane.f32.xlu0 %v1278
      %v1324 = vpop.xlane.xlu0 %1323
      %1325 = vadd.xlane.f32.xlu0 %v1279
      %v1326 = vpop.xlane.xlu0 %1325
      %1327 = vadd.xlane.f32.xlu0 %v1280
      %v1328 = vpop.xlane.xlu0 %1327
      %1329 = vadd.xlane.f32.xlu0 %v1281
      %v1330 = vpop.xlane.xlu0 %1329
      %1331 = vadd.xlane.f32.xlu0 %v1282
      %v1332 = vpop.xlane.xlu0 %1331
      %1333 = vadd.xlane.f32.xlu0 %v1283
      %v1334 = vpop.xlane.xlu0 %1333
      %1335 = vadd.xlane.f32.xlu0 %v1284
      %v1336 = vpop.xlane.xlu0 %1335
      %1337 = vadd.xlane.f32.xlu0 %v1285
      %v1338 = vpop.xlane.xlu0 %1337
      %1339 = vadd.xlane.f32.xlu0 %v1286
      %v1340 = vpop.xlane.xlu0 %1339
      %1341 = vadd.xlane.f32.xlu0 %v1287
      %v1342 = vpop.xlane.xlu0 %1341
      %1343 = vadd.xlane.f32.xlu0 %v1288
      %v1344 = vpop.xlane.xlu0 %1343
      %1345 = vadd.xlane.f32.xlu0 %v1289
      %v1346 = vpop.xlane.xlu0 %1345
      %1347 = vadd.xlane.f32.xlu0 %v1290
      %v1348 = vpop.xlane.xlu0 %1347
      %1349 = vadd.xlane.f32.xlu0 %v1291
      %v1350 = vpop.xlane.xlu0 %1349
      %1351 = vadd.xlane.f32.xlu0 %v1292
      %v1352 = vpop.xlane.xlu0 %1351
      %1353 = vadd.xlane.f32.xlu0 %v1293
      %v1354 = vpop.xlane.xlu0 %1353
      %1355 = vadd.xlane.f32.xlu0 %v1294
      %v1356 = vpop.xlane.xlu0 %1355
      %1357 = vadd.xlane.f32.xlu0 %v1295
      %v1358 = vpop.xlane.xlu0 %1357
      %1359 = vadd.xlane.f32.xlu0 %v1296
      %v1360 = vpop.xlane.xlu0 %1359
      %v1361 = vmul.f32 %v1298, 0.03125
      %v1362 = vmul.f32 %v1300, 0.03125
      %v1363 = vmul.f32 %v1302, 0.03125
      %v1364 = vmul.f32 %v1304, 0.03125
      %v1365 = vmul.f32 %v1306, 0.03125
      %v1366 = vmul.f32 %v1308, 0.03125
      %v1367 = vmul.f32 %v1310, 0.03125
      %v1368 = vmul.f32 %v1312, 0.03125
      %v1369 = vmul.f32 %v1314, 0.03125
      %v1370 = vmul.f32 %v1316, 0.03125
      %v1371 = vmul.f32 %v1318, 0.03125
      %v1372 = vmul.f32 %v1320, 0.03125
      %v1373 = vmul.f32 %v1322, 0.03125
      %v1374 = vmul.f32 %v1324, 0.03125
      %v1375 = vmul.f32 %v1326, 0.03125
      %v1376 = vmul.f32 %v1328, 0.03125
      %v1377 = vmul.f32 %v1330, 0.03125
      %v1378 = vmul.f32 %v1332, 0.03125
      %v1379 = vmul.f32 %v1334, 0.03125
      %v1380 = vmul.f32 %v1336, 0.03125
      %v1381 = vmul.f32 %v1338, 0.03125
      %v1382 = vmul.f32 %v1340, 0.03125
      %v1383 = vmul.f32 %v1342, 0.03125
      %v1384 = vmul.f32 %v1344, 0.03125
      %v1385 = vmul.f32 %v1346, 0.03125
      %v1386 = vmul.f32 %v1348, 0.03125
      %v1387 = vmul.f32 %v1350, 0.03125
      %v1388 = vmul.f32 %v1352, 0.03125
      %v1389 = vmul.f32 %v1354, 0.03125
      %v1390 = vmul.f32 %v1356, 0.03125
      %v1391 = vmul.f32 %v1358, 0.03125
      %v1392 = vmul.f32 %v1360, 0.03125
      %v1393 = vadd.f32 %v1361, 1e-05
      %v1394 = vadd.f32 %v1362, 1e-05
      %v1395 = vadd.f32 %v1363, 1e-05
      %v1396 = vadd.f32 %v1364, 1e-05
      %v1397 = vadd.f32 %v1365, 1e-05
      %v1398 = vadd.f32 %v1366, 1e-05
      %v1399 = vadd.f32 %v1367, 1e-05
      %v1400 = vadd.f32 %v1368, 1e-05
      %v1401 = vadd.f32 %v1369, 1e-05
      %v1402 = vadd.f32 %v1370, 1e-05
      %v1403 = vadd.f32 %v1371, 1e-05
      %v1404 = vadd.f32 %v1372, 1e-05
      %v1405 = vadd.f32 %v1373, 1e-05
      %v1406 = vadd.f32 %v1374, 1e-05
      %v1407 = vadd.f32 %v1375, 1e-05
      %v1408 = vadd.f32 %v1376, 1e-05
      %v1409 = vadd.f32 %v1377, 1e-05
      %v1410 = vadd.f32 %v1378, 1e-05
      %v1411 = vadd.f32 %v1379, 1e-05
      %v1412 = vadd.f32 %v1380, 1e-05
      %v1413 = vadd.f32 %v1381, 1e-05
      %v1414 = vadd.f32 %v1382, 1e-05
      %v1415 = vadd.f32 %v1383, 1e-05
      %v1416 = vadd.f32 %v1384, 1e-05
      %v1417 = vadd.f32 %v1385, 1e-05
      %v1418 = vadd.f32 %v1386, 1e-05
      %v1419 = vadd.f32 %v1387, 1e-05
      %v1420 = vadd.f32 %v1388, 1e-05
      %v1421 = vadd.f32 %v1389, 1e-05
      %v1422 = vadd.f32 %v1390, 1e-05
      %v1423 = vadd.f32 %v1391, 1e-05
      %v1424 = vadd.f32 %v1392, 1e-05
      %v1425 = vrsqrt.pop %v1393
      %v1426 = vmul.f32 %v1425, %v1393
      %v1427 = vmul.f32 %v1426, %v1425
      %v1428 = vmul.f32 0.5, %v1427
      %v1429 = vsub.f32 1.5, %v1428
      %v1430 = vmul.f32 %v1425, %v1429
      %vm1431 = vweird.f32 %v1393
      %vm1432 = vweird.f32 %v1425
      %vm1433 = vmor %vm1431, %vm1432
      %v1434 = vsel %vm1433, %v1425, %v1430
      %v1435 = vrsqrt.pop %v1394
      %v1436 = vmul.f32 %v1435, %v1394
      %v1437 = vmul.f32 %v1436, %v1435
      %v1438 = vmul.f32 0.5, %v1437
      %v1439 = vsub.f32 1.5, %v1438
      %v1440 = vmul.f32 %v1435, %v1439
      %vm1441 = vweird.f32 %v1394
      %vm1442 = vweird.f32 %v1435
      %vm1443 = vmor %vm1441, %vm1442
      %v1444 = vsel %vm1443, %v1435, %v1440
      %v1445 = vrsqrt.pop %v1395
      %v1446 = vmul.f32 %v1445, %v1395
      %v1447 = vmul.f32 %v1446, %v1445
      %v1448 = vmul.f32 0.5, %v1447
      %v1449 = vsub.f32 1.5, %v1448
      %v1450 = vmul.f32 %v1445, %v1449
      %vm1451 = vweird.f32 %v1395
      %vm1452 = vweird.f32 %v1445
      %vm1453 = vmor %vm1451, %vm1452
      %v1454 = vsel %vm1453, %v1445, %v1450
      %v1455 = vrsqrt.pop %v1396
      %v1456 = vmul.f32 %v1455, %v1396
      %v1457 = vmul.f32 %v1456, %v1455
      %v1458 = vmul.f32 0.5, %v1457
      %v1459 = vsub.f32 1.5, %v1458
      %v1460 = vmul.f32 %v1455, %v1459
      %vm1461 = vweird.f32 %v1396
      %vm1462 = vweird.f32 %v1455
      %vm1463 = vmor %vm1461, %vm1462
      %v1464 = vsel %vm1463, %v1455, %v1460
      %v1465 = vrsqrt.pop %v1397
      %v1466 = vmul.f32 %v1465, %v1397
      %v1467 = vmul.f32 %v1466, %v1465
      %v1468 = vmul.f32 0.5, %v1467
      %v1469 = vsub.f32 1.5, %v1468
      %v1470 = vmul.f32 %v1465, %v1469
      %vm1471 = vweird.f32 %v1397
      %vm1472 = vweird.f32 %v1465
      %vm1473 = vmor %vm1471, %vm1472
      %v1474 = vsel %vm1473, %v1465, %v1470
      %v1475 = vrsqrt.pop %v1398
      %v1476 = vmul.f32 %v1475, %v1398
      %v1477 = vmul.f32 %v1476, %v1475
      %v1478 = vmul.f32 0.5, %v1477
      %v1479 = vsub.f32 1.5, %v1478
      %v1480 = vmul.f32 %v1475, %v1479
      %vm1481 = vweird.f32 %v1398
      %vm1482 = vweird.f32 %v1475
      %vm1483 = vmor %vm1481, %vm1482
      %v1484 = vsel %vm1483, %v1475, %v1480
      %v1485 = vrsqrt.pop %v1399
      %v1486 = vmul.f32 %v1485, %v1399
      %v1487 = vmul.f32 %v1486, %v1485
      %v1488 = vmul.f32 0.5, %v1487
      %v1489 = vsub.f32 1.5, %v1488
      %v1490 = vmul.f32 %v1485, %v1489
      %vm1491 = vweird.f32 %v1399
      %vm1492 = vweird.f32 %v1485
      %vm1493 = vmor %vm1491, %vm1492
      %v1494 = vsel %vm1493, %v1485, %v1490
      %v1495 = vrsqrt.pop %v1400
      %v1496 = vmul.f32 %v1495, %v1400
      %v1497 = vmul.f32 %v1496, %v1495
      %v1498 = vmul.f32 0.5, %v1497
      %v1499 = vsub.f32 1.5, %v1498
      %v1500 = vmul.f32 %v1495, %v1499
      %vm1501 = vweird.f32 %v1400
      %vm1502 = vweird.f32 %v1495
      %vm1503 = vmor %vm1501, %vm1502
      %v1504 = vsel %vm1503, %v1495, %v1500
      %v1505 = vrsqrt.pop %v1401
      %v1506 = vmul.f32 %v1505, %v1401
      %v1507 = vmul.f32 %v1506, %v1505
      %v1508 = vmul.f32 0.5, %v1507
      %v1509 = vsub.f32 1.5, %v1508
      %v1510 = vmul.f32 %v1505, %v1509
      %vm1511 = vweird.f32 %v1401
      %vm1512 = vweird.f32 %v1505
      %vm1513 = vmor %vm1511, %vm1512
      %v1514 = vsel %vm1513, %v1505, %v1510
      %v1515 = vrsqrt.pop %v1402
      %v1516 = vmul.f32 %v1515, %v1402
      %v1517 = vmul.f32 %v1516, %v1515
      %v1518 = vmul.f32 0.5, %v1517
      %v1519 = vsub.f32 1.5, %v1518
      %v1520 = vmul.f32 %v1515, %v1519
      %vm1521 = vweird.f32 %v1402
      %vm1522 = vweird.f32 %v1515
      %vm1523 = vmor %vm1521, %vm1522
      %v1524 = vsel %vm1523, %v1515, %v1520
      %v1525 = vrsqrt.pop %v1403
      %v1526 = vmul.f32 %v1525, %v1403
      %v1527 = vmul.f32 %v1526, %v1525
      %v1528 = vmul.f32 0.5, %v1527
      %v1529 = vsub.f32 1.5, %v1528
      %v1530 = vmul.f32 %v1525, %v1529
      %vm1531 = vweird.f32 %v1403
      %vm1532 = vweird.f32 %v1525
      %vm1533 = vmor %vm1531, %vm1532
      %v1534 = vsel %vm1533, %v1525, %v1530
      %v1535 = vrsqrt.pop %v1404
      %v1536 = vmul.f32 %v1535, %v1404
      %v1537 = vmul.f32 %v1536, %v1535
      %v1538 = vmul.f32 0.5, %v1537
      %v1539 = vsub.f32 1.5, %v1538
      %v1540 = vmul.f32 %v1535, %v1539
      %vm1541 = vweird.f32 %v1404
      %vm1542 = vweird.f32 %v1535
      %vm1543 = vmor %vm1541, %vm1542
      %v1544 = vsel %vm1543, %v1535, %v1540
      %v1545 = vrsqrt.pop %v1405
      %v1546 = vmul.f32 %v1545, %v1405
      %v1547 = vmul.f32 %v1546, %v1545
      %v1548 = vmul.f32 0.5, %v1547
      %v1549 = vsub.f32 1.5, %v1548
      %v1550 = vmul.f32 %v1545, %v1549
      %vm1551 = vweird.f32 %v1405
      %vm1552 = vweird.f32 %v1545
      %vm1553 = vmor %vm1551, %vm1552
      %v1554 = vsel %vm1553, %v1545, %v1550
      %v1555 = vrsqrt.pop %v1406
      %v1556 = vmul.f32 %v1555, %v1406
      %v1557 = vmul.f32 %v1556, %v1555
      %v1558 = vmul.f32 0.5, %v1557
      %v1559 = vsub.f32 1.5, %v1558
      %v1560 = vmul.f32 %v1555, %v1559
      %vm1561 = vweird.f32 %v1406
      %vm1562 = vweird.f32 %v1555
      %vm1563 = vmor %vm1561, %vm1562
      %v1564 = vsel %vm1563, %v1555, %v1560
      %v1565 = vrsqrt.pop %v1407
      %v1566 = vmul.f32 %v1565, %v1407
      %v1567 = vmul.f32 %v1566, %v1565
      %v1568 = vmul.f32 0.5, %v1567
      %v1569 = vsub.f32 1.5, %v1568
      %v1570 = vmul.f32 %v1565, %v1569
      %vm1571 = vweird.f32 %v1407
      %vm1572 = vweird.f32 %v1565
      %vm1573 = vmor %vm1571, %vm1572
      %v1574 = vsel %vm1573, %v1565, %v1570
      %v1575 = vrsqrt.pop %v1408
      %v1576 = vmul.f32 %v1575, %v1408
      %v1577 = vmul.f32 %v1576, %v1575
      %v1578 = vmul.f32 0.5, %v1577
      %v1579 = vsub.f32 1.5, %v1578
      %v1580 = vmul.f32 %v1575, %v1579
      %vm1581 = vweird.f32 %v1408
      %vm1582 = vweird.f32 %v1575
      %vm1583 = vmor %vm1581, %vm1582
      %v1584 = vsel %vm1583, %v1575, %v1580
      %v1585 = vrsqrt.pop %v1409
      %v1586 = vmul.f32 %v1585, %v1409
      %v1587 = vmul.f32 %v1586, %v1585
      %v1588 = vmul.f32 0.5, %v1587
      %v1589 = vsub.f32 1.5, %v1588
      %v1590 = vmul.f32 %v1585, %v1589
      %vm1591 = vweird.f32 %v1409
      %vm1592 = vweird.f32 %v1585
      %vm1593 = vmor %vm1591, %vm1592
      %v1594 = vsel %vm1593, %v1585, %v1590
      %v1595 = vrsqrt.pop %v1410
      %v1596 = vmul.f32 %v1595, %v1410
      %v1597 = vmul.f32 %v1596, %v1595
      %v1598 = vmul.f32 0.5, %v1597
      %v1599 = vsub.f32 1.5, %v1598
      %v1600 = vmul.f32 %v1595, %v1599
      %vm1601 = vweird.f32 %v1410
      %vm1602 = vweird.f32 %v1595
      %vm1603 = vmor %vm1601, %vm1602
      %v1604 = vsel %vm1603, %v1595, %v1600
      %v1605 = vrsqrt.pop %v1411
      %v1606 = vmul.f32 %v1605, %v1411
      %v1607 = vmul.f32 %v1606, %v1605
      %v1608 = vmul.f32 0.5, %v1607
      %v1609 = vsub.f32 1.5, %v1608
      %v1610 = vmul.f32 %v1605, %v1609
      %vm1611 = vweird.f32 %v1411
      %vm1612 = vweird.f32 %v1605
      %vm1613 = vmor %vm1611, %vm1612
      %v1614 = vsel %vm1613, %v1605, %v1610
      %v1615 = vrsqrt.pop %v1412
      %v1616 = vmul.f32 %v1615, %v1412
      %v1617 = vmul.f32 %v1616, %v1615
      %v1618 = vmul.f32 0.5, %v1617
      %v1619 = vsub.f32 1.5, %v1618
      %v1620 = vmul.f32 %v1615, %v1619
      %vm1621 = vweird.f32 %v1412
      %vm1622 = vweird.f32 %v1615
      %vm1623 = vmor %vm1621, %vm1622
      %v1624 = vsel %vm1623, %v1615, %v1620
      %v1625 = vrsqrt.pop %v1413
      %v1626 = vmul.f32 %v1625, %v1413
      %v1627 = vmul.f32 %v1626, %v1625
      %v1628 = vmul.f32 0.5, %v1627
      %v1629 = vsub.f32 1.5, %v1628
      %v1630 = vmul.f32 %v1625, %v1629
      %vm1631 = vweird.f32 %v1413
      %vm1632 = vweird.f32 %v1625
      %vm1633 = vmor %vm1631, %vm1632
      %v1634 = vsel %vm1633, %v1625, %v1630
      %v1635 = vrsqrt.pop %v1414
      %v1636 = vmul.f32 %v1635, %v1414
      %v1637 = vmul.f32 %v1636, %v1635
      %v1638 = vmul.f32 0.5, %v1637
      %v1639 = vsub.f32 1.5, %v1638
      %v1640 = vmul.f32 %v1635, %v1639
      %vm1641 = vweird.f32 %v1414
      %vm1642 = vweird.f32 %v1635
      %vm1643 = vmor %vm1641, %vm1642
      %v1644 = vsel %vm1643, %v1635, %v1640
      %v1645 = vrsqrt.pop %v1415
      %v1646 = vmul.f32 %v1645, %v1415
      %v1647 = vmul.f32 %v1646, %v1645
      %v1648 = vmul.f32 0.5, %v1647
      %v1649 = vsub.f32 1.5, %v1648
      %v1650 = vmul.f32 %v1645, %v1649
      %vm1651 = vweird.f32 %v1415
      %vm1652 = vweird.f32 %v1645
      %vm1653 = vmor %vm1651, %vm1652
      %v1654 = vsel %vm1653, %v1645, %v1650
      %v1655 = vrsqrt.pop %v1416
      %v1656 = vmul.f32 %v1655, %v1416
      %v1657 = vmul.f32 %v1656, %v1655
      %v1658 = vmul.f32 0.5, %v1657
      %v1659 = vsub.f32 1.5, %v1658
      %v1660 = vmul.f32 %v1655, %v1659
      %vm1661 = vweird.f32 %v1416
      %vm1662 = vweird.f32 %v1655
      %vm1663 = vmor %vm1661, %vm1662
      %v1664 = vsel %vm1663, %v1655, %v1660
      %v1665 = vrsqrt.pop %v1417
      %v1666 = vmul.f32 %v1665, %v1417
      %v1667 = vmul.f32 %v1666, %v1665
      %v1668 = vmul.f32 0.5, %v1667
      %v1669 = vsub.f32 1.5, %v1668
      %v1670 = vmul.f32 %v1665, %v1669
      %vm1671 = vweird.f32 %v1417
      %vm1672 = vweird.f32 %v1665
      %vm1673 = vmor %vm1671, %vm1672
      %v1674 = vsel %vm1673, %v1665, %v1670
      %v1675 = vrsqrt.pop %v1418
      %v1676 = vmul.f32 %v1675, %v1418
      %v1677 = vmul.f32 %v1676, %v1675
      %v1678 = vmul.f32 0.5, %v1677
      %v1679 = vsub.f32 1.5, %v1678
      %v1680 = vmul.f32 %v1675, %v1679
      %vm1681 = vweird.f32 %v1418
      %vm1682 = vweird.f32 %v1675
      %vm1683 = vmor %vm1681, %vm1682
      %v1684 = vsel %vm1683, %v1675, %v1680
      %v1685 = vrsqrt.pop %v1419
      %v1686 = vmul.f32 %v1685, %v1419
      %v1687 = vmul.f32 %v1686, %v1685
      %v1688 = vmul.f32 0.5, %v1687
      %v1689 = vsub.f32 1.5, %v1688
      %v1690 = vmul.f32 %v1685, %v1689
      %vm1691 = vweird.f32 %v1419
      %vm1692 = vweird.f32 %v1685
      %vm1693 = vmor %vm1691, %vm1692
      %v1694 = vsel %vm1693, %v1685, %v1690
      %v1695 = vrsqrt.pop %v1420
      %v1696 = vmul.f32 %v1695, %v1420
      %v1697 = vmul.f32 %v1696, %v1695
      %v1698 = vmul.f32 0.5, %v1697
      %v1699 = vsub.f32 1.5, %v1698
      %v1700 = vmul.f32 %v1695, %v1699
      %vm1701 = vweird.f32 %v1420
      %vm1702 = vweird.f32 %v1695
      %vm1703 = vmor %vm1701, %vm1702
      %v1704 = vsel %vm1703, %v1695, %v1700
      %v1705 = vrsqrt.pop %v1421
      %v1706 = vmul.f32 %v1705, %v1421
      %v1707 = vmul.f32 %v1706, %v1705
      %v1708 = vmul.f32 0.5, %v1707
      %v1709 = vsub.f32 1.5, %v1708
      %v1710 = vmul.f32 %v1705, %v1709
      %vm1711 = vweird.f32 %v1421
      %vm1712 = vweird.f32 %v1705
      %vm1713 = vmor %vm1711, %vm1712
      %v1714 = vsel %vm1713, %v1705, %v1710
      %v1715 = vrsqrt.pop %v1422
      %v1716 = vmul.f32 %v1715, %v1422
      %v1717 = vmul.f32 %v1716, %v1715
      %v1718 = vmul.f32 0.5, %v1717
      %v1719 = vsub.f32 1.5, %v1718
      %v1720 = vmul.f32 %v1715, %v1719
      %vm1721 = vweird.f32 %v1422
      %vm1722 = vweird.f32 %v1715
      %vm1723 = vmor %vm1721, %vm1722
      %v1724 = vsel %vm1723, %v1715, %v1720
      %v1725 = vrsqrt.pop %v1423
      %v1726 = vmul.f32 %v1725, %v1423
      %v1727 = vmul.f32 %v1726, %v1725
      %v1728 = vmul.f32 0.5, %v1727
      %v1729 = vsub.f32 1.5, %v1728
      %v1730 = vmul.f32 %v1725, %v1729
      %vm1731 = vweird.f32 %v1423
      %vm1732 = vweird.f32 %v1725
      %vm1733 = vmor %vm1731, %vm1732
      %v1734 = vsel %vm1733, %v1725, %v1730
      %v1735 = vrsqrt.pop %v1424
      %v1736 = vmul.f32 %v1735, %v1424
      %v1737 = vmul.f32 %v1736, %v1735
      %v1738 = vmul.f32 0.5, %v1737
      %v1739 = vsub.f32 1.5, %v1738
      %v1740 = vmul.f32 %v1735, %v1739
      %vm1741 = vweird.f32 %v1424
      %vm1742 = vweird.f32 %v1735
      %vm1743 = vmor %vm1741, %vm1742
      %v1744 = vsel %vm1743, %v1735, %v1740
      %v1745 = vmul.f32 %v1233, %v1434
      %v1746 = vmul.f32 %v1234, %v1444
      %v1747 = vmul.f32 %v1235, %v1454
      %v1748 = vmul.f32 %v1236, %v1464
      %v1749 = vmul.f32 %v1237, %v1474
      %v1750 = vmul.f32 %v1238, %v1484
      %v1751 = vmul.f32 %v1239, %v1494
      %v1752 = vmul.f32 %v1240, %v1504
      %v1753 = vmul.f32 %v1241, %v1514
      %v1754 = vmul.f32 %v1242, %v1524
      %v1755 = vmul.f32 %v1243, %v1534
      %v1756 = vmul.f32 %v1244, %v1544
      %v1757 = vmul.f32 %v1245, %v1554
      %v1758 = vmul.f32 %v1246, %v1564
      %v1759 = vmul.f32 %v1247, %v1574
      %v1760 = vmul.f32 %v1248, %v1584
      %v1761 = vmul.f32 %v1249, %v1594
      %v1762 = vmul.f32 %v1250, %v1604
      %v1763 = vmul.f32 %v1251, %v1614
      %v1764 = vmul.f32 %v1252, %v1624
      %v1765 = vmul.f32 %v1253, %v1634
      %v1766 = vmul.f32 %v1254, %v1644
      %v1767 = vmul.f32 %v1255, %v1654
      %v1768 = vmul.f32 %v1256, %v1664
      %v1769 = vmul.f32 %v1257, %v1674
      %v1770 = vmul.f32 %v1258, %v1684
      %v1771 = vmul.f32 %v1259, %v1694
      %v1772 = vmul.f32 %v1260, %v1704
      %v1773 = vmul.f32 %v1261, %v1714
      %v1774 = vmul.f32 %v1262, %v1724
      %v1775 = vmul.f32 %v1263, %v1734
      %v1776 = vmul.f32 %v1264, %v1744
      %v1777 = vld [vmem:[%s7] sm:$0x1]
      %v1779 = vperm.slane %v1777, 0
      %v1781 = vmul.f32 %v1745, %v1779
      %v1782 = vmul.f32 %v1746, %v1779
      %v1783 = vmul.f32 %v1747, %v1779
      %v1784 = vmul.f32 %v1748, %v1779
      %v1785 = vmul.f32 %v1749, %v1779
      %v1786 = vmul.f32 %v1750, %v1779
      %v1787 = vmul.f32 %v1751, %v1779
      %v1788 = vmul.f32 %v1752, %v1779
      %v1789 = vmul.f32 %v1753, %v1779
      %v1790 = vmul.f32 %v1754, %v1779
      %v1791 = vmul.f32 %v1755, %v1779
      %v1792 = vmul.f32 %v1756, %v1779
      %v1793 = vmul.f32 %v1757, %v1779
      %v1794 = vmul.f32 %v1758, %v1779
      %v1795 = vmul.f32 %v1759, %v1779
      %v1796 = vmul.f32 %v1760, %v1779
      %v1797 = vmul.f32 %v1761, %v1779
      %v1798 = vmul.f32 %v1762, %v1779
      %v1799 = vmul.f32 %v1763, %v1779
      %v1800 = vmul.f32 %v1764, %v1779
      %v1801 = vmul.f32 %v1765, %v1779
      %v1802 = vmul.f32 %v1766, %v1779
      %v1803 = vmul.f32 %v1767, %v1779
      %v1804 = vmul.f32 %v1768, %v1779
      %v1805 = vmul.f32 %v1769, %v1779
      %v1806 = vmul.f32 %v1770, %v1779
      %v1807 = vmul.f32 %v1771, %v1779
      %v1808 = vmul.f32 %v1772, %v1779
      %v1809 = vmul.f32 %v1773, %v1779
      %v1810 = vmul.f32 %v1774, %v1779
      %v1811 = vmul.f32 %v1775, %v1779
      %v1812 = vmul.f32 %v1776, %v1779
      %v1813 = vld [vmem:[%s8] sm:$0x1]
      %v1815 = vperm.slane %v1813, 0
      %v1817 = vadd.f32 %v1781, %v1815
      %v1818 = vadd.f32 %v1782, %v1815
      %v1819 = vadd.f32 %v1783, %v1815
      %v1820 = vadd.f32 %v1784, %v1815
      %v1821 = vadd.f32 %v1785, %v1815
      %v1822 = vadd.f32 %v1786, %v1815
      %v1823 = vadd.f32 %v1787, %v1815
      %v1824 = vadd.f32 %v1788, %v1815
      %v1825 = vadd.f32 %v1789, %v1815
      %v1826 = vadd.f32 %v1790, %v1815
      %v1827 = vadd.f32 %v1791, %v1815
      %v1828 = vadd.f32 %v1792, %v1815
      %v1829 = vadd.f32 %v1793, %v1815
      %v1830 = vadd.f32 %v1794, %v1815
      %v1831 = vadd.f32 %v1795, %v1815
      %v1832 = vadd.f32 %v1796, %v1815
      %v1833 = vadd.f32 %v1797, %v1815
      %v1834 = vadd.f32 %v1798, %v1815
      %v1835 = vadd.f32 %v1799, %v1815
      %v1836 = vadd.f32 %v1800, %v1815
      %v1837 = vadd.f32 %v1801, %v1815
      %v1838 = vadd.f32 %v1802, %v1815
      %v1839 = vadd.f32 %v1803, %v1815
      %v1840 = vadd.f32 %v1804, %v1815
      %v1841 = vadd.f32 %v1805, %v1815
      %v1842 = vadd.f32 %v1806, %v1815
      %v1843 = vadd.f32 %v1807, %v1815
      %v1844 = vadd.f32 %v1808, %v1815
      %v1845 = vadd.f32 %v1809, %v1815
      %v1846 = vadd.f32 %v1810, %v1815
      %v1847 = vadd.f32 %v1811, %v1815
      %v1848 = vadd.f32 %v1812, %v1815
      %1849 = vst [vmem:[#allocation8] sm:$0xff] %v1817
      %1850 = vst [vmem:[#allocation8 + $0x8] sm:$0xff] %v1818
      %1851 = vst [vmem:[#allocation8 + $0x10] sm:$0xff] %v1819
      %1852 = vst [vmem:[#allocation8 + $0x18] sm:$0xff] %v1820
      %1853 = vst [vmem:[#allocation8 + $0x20] sm:$0xff] %v1821
      %1854 = vst [vmem:[#allocation8 + $0x28] sm:$0xff] %v1822
      %1855 = vst [vmem:[#allocation8 + $0x30] sm:$0xff] %v1823
      %1856 = vst [vmem:[#allocation8 + $0x38] sm:$0xff] %v1824
      %1857 = vst [vmem:[#allocation8 + $0x40] sm:$0xff] %v1825
      %1858 = vst [vmem:[#allocation8 + $0x48] sm:$0xff] %v1826
      %1859 = vst [vmem:[#allocation8 + $0x50] sm:$0xff] %v1827
      %1860 = vst [vmem:[#allocation8 + $0x58] sm:$0xff] %v1828
      %1861 = vst [vmem:[#allocation8 + $0x60] sm:$0xff] %v1829
      %1862 = vst [vmem:[#allocation8 + $0x68] sm:$0xff] %v1830
      %1863 = vst [vmem:[#allocation8 + $0x70] sm:$0xff] %v1831
      %1864 = vst [vmem:[#allocation8 + $0x78] sm:$0xff] %v1832
      %1865 = vst [vmem:[#allocation8 + $0x80] sm:$0xff] %v1833
      %1866 = vst [vmem:[#allocation8 + $0x88] sm:$0xff] %v1834
      %1867 = vst [vmem:[#allocation8 + $0x90] sm:$0xff] %v1835
      %1868 = vst [vmem:[#allocation8 + $0x98] sm:$0xff] %v1836
      %1869 = vst [vmem:[#allocation8 + $0xa0] sm:$0xff] %v1837
      %1870 = vst [vmem:[#allocation8 + $0xa8] sm:$0xff] %v1838
      %1871 = vst [vmem:[#allocation8 + $0xb0] sm:$0xff] %v1839
      %1872 = vst [vmem:[#allocation8 + $0xb8] sm:$0xff] %v1840
      %1873 = vst [vmem:[#allocation8 + $0xc0] sm:$0xff] %v1841
      %1874 = vst [vmem:[#allocation8 + $0xc8] sm:$0xff] %v1842
      %1875 = vst [vmem:[#allocation8 + $0xd0] sm:$0xff] %v1843
      %1876 = vst [vmem:[#allocation8 + $0xd8] sm:$0xff] %v1844
      %1877 = vst [vmem:[#allocation8 + $0xe0] sm:$0xff] %v1845
      %1878 = vst [vmem:[#allocation8 + $0xe8] sm:$0xff] %v1846
      %1879 = vst [vmem:[#allocation8 + $0xf0] sm:$0xff] %v1847
      %1880 = vst [vmem:[#allocation8 + $0xf8] sm:$0xff] %v1848
    $region57: #{tpu_custom_call.1} parent=1 // pred_fallthru
      _
    // Predicated region
    $region58: #{tpu_custom_call.1} parent=1 // pred_check
      _
    $region59: #{tpu_custom_call.1} parent=1 // pred_check_branch
      %1882 = sbr.rel (0) target = $region61
    $region60: #{tpu_custom_call.1} parent=1 // pred_region
      %1884 = vsyncadd [#allocation5], 0
      %s1885 = sshll.u32 [#allocation8], 4
      %s1886 = int_to_ptr.vmem [resolvable:$true] %s1885
      %s1887 = sshll.u32 %s9, 4
      %s1888 = int_to_ptr.hbm [resolvable:$true] %s1887
      %1893 = dma.vmem_to_hbm [thread:$0]  %s1886, 4096, %s1888, [#allocation5], 128, 128, 8
    $region61: #{tpu_custom_call.1} parent=1 // pred_fallthru
      _
    // Predicated region
    $region62: #{tpu_custom_call.1} parent=1 // pred_check
      _
    $region63: #{tpu_custom_call.1} parent=1 // pred_check_branch
      %1895 = sbr.rel (0) target = $region65
    $region64: #{tpu_custom_call.1} parent=1 // pred_region
      %1897 = dma.done [#allocation5], 4096
    $region65: #{tpu_custom_call.1} parent=1 // pred_fallthru
      _
    %1898 = vsyncpa [#allocation4], 1
    %1899 = vsyncpa [#allocation7], 1
    %1900 = vsyncpa [#allocation5], 1

</llo_original>
